<compile_context>
chip_gen: v6e
topology: v6e:2x2x1
jax: 0.10.0
libtpu: 0.0.40
codegen_flags: <defaults>
</compile_context>

<pallas_src>
import jax
import jax.numpy as jnp
from jax.experimental import pallas as pl
from jax.experimental.pallas import tpu as pltpu


# --------------------------- Fused forward kernel ----------------------------
def _make_fused_kernel(num_layers, T, B, H, O):
    """Kernel args: x2d, (wih_t, whh_t, bias) per layer, w_out_t, b_out,
    then out_ref, then VMEM scratch for per-layer activations."""

    def kernel(x_ref, *refs):
        act_sc = refs[-1]                       # VMEM scratch (T*B, H) f32
        o_ref = refs[-2]                        # output (T*B, O)
        w_out_ref = refs[3 * num_layers]
        b_out_ref = refs[3 * num_layers + 1]

        cur = x_ref[...].astype(jnp.float32)    # (T*B, I) for layer 0

        for layer in range(num_layers):
            wih_ref = refs[3 * layer + 0]       # (I or H, 4H)
            whh_ref = refs[3 * layer + 1]       # (H, 4H)
            b_ref = refs[3 * layer + 2]         # (1, 4H) = b_ih + b_hh

            # Hoisted input projection for ALL timesteps + bias folded once.
            xg = (jnp.dot(cur, wih_ref[...],
                          preferred_element_type=jnp.float32)
                  + b_ref[...])                 # (T*B, 4H)
            whh = whh_ref[...]                  # (H, 4H), loaded once

            h = jnp.zeros((B, H), jnp.float32)
            c = jnp.zeros((B, H), jnp.float32)

            # Static (fully unrolled) recurrence — T is small and fixed.
            for t in range(T):
                g = xg[t * B:(t + 1) * B, :] + jnp.dot(
                    h, whh, preferred_element_type=jnp.float32)   # (B, 4H)
                # PyTorch gate order: i, f, g, o
                i_g = jax.nn.sigmoid(g[:, 0 * H:1 * H])
                f_g = jax.nn.sigmoid(g[:, 1 * H:2 * H])
                g_g = jnp.tanh(g[:, 2 * H:3 * H])
                o_g = jax.nn.sigmoid(g[:, 3 * H:4 * H])
                c = f_g * c + i_g * g_g
                h = o_g * jnp.tanh(c)
                act_sc[t * B:(t + 1) * B, :] = h

            cur = act_sc[...]                   # (T*B, H) -> next layer / head

        # Linear head on the flattened activations, single output store.
        out = (jnp.dot(cur, w_out_ref[...],
                       preferred_element_type=jnp.float32)
               + b_out_ref[...])                # (T*B, O)
        o_ref[...] = out.astype(o_ref.dtype)

    return kernel


def rnn_forward(x, params):
    """x: (T, B, I); params as produced by init_params -> (T, B, O)."""
    T, B, I = x.shape
    lstm_params = params["lstm"]
    num_layers = len(lstm_params)
    H = lstm_params[0][1].shape[1]
    w_out, b_out = params["out"]
    O = w_out.shape[0]

    flat_args = []
    for (w_ih, w_hh, b_ih, b_hh) in lstm_params:
        flat_args.append(jnp.transpose(w_ih))                  # (I or H, 4H)
        flat_args.append(jnp.transpose(w_hh))                  # (H, 4H)
        flat_args.append((b_ih + b_hh).reshape(1, 4 * H))      # folded bias
    flat_args.append(jnp.transpose(w_out))                     # (H, O)
    flat_args.append(b_out.reshape(1, O))

    n_in = 1 + len(flat_args)
    vmem_spec = pl.BlockSpec(memory_space=pltpu.MemorySpace.VMEM)

    out2d = pl.pallas_call(
        _make_fused_kernel(num_layers, T, B, H, O),
        out_shape=jax.ShapeDtypeStruct((T * B, O), x.dtype),
        in_specs=[pl.BlockSpec(memory_space=pltpu.MemorySpace.VMEM)
                  for _ in range(n_in)],
        out_specs=vmem_spec,
        scratch_shapes=[pltpu.VMEM((T * B, H), jnp.float32)],
    )(x.reshape(T * B, I), *flat_args)

    return out2d.reshape(T, B, O)


# ------------------------------ Param init ------------------------------------
def init_params(key, lstm_num, hidden, in_ch, out_ch):
    bound = 1.0 / jnp.sqrt(jnp.float32(hidden))
    params = {"lstm": [], "out": None}
    for layer in range(lstm_num):
        isz = in_ch if layer == 0 else hidden
        key, k1, k2, k3, k4 = jax.random.split(key, 5)
        w_ih = jax.random.uniform(k1, (4 * hidden, isz), jnp.float32, -bound, bound)
        w_hh = jax.random.uniform(k2, (4 * hidden, hidden), jnp.float32, -bound, bound)
        b_ih = jax.random.uniform(k3, (4 * hidden,), jnp.float32, -bound, bound)
        b_hh = jax.random.uniform(k4, (4 * hidden,), jnp.float32, -bound, bound)
        params["lstm"].append((w_ih, w_hh, b_ih, b_hh))
    key, k5, k6 = jax.random.split(key, 3)
    w_out = jax.random.uniform(k5, (out_ch, hidden), jnp.float32, -bound, bound)
    b_out = jax.random.uniform(k6, (out_ch,), jnp.float32, -bound, bound)
    params["out"] = (w_out, b_out)
    return params


# ---------------------------- Pure-JAX reference ------------------------------
def lstm_layer_ref(x, w_ih, w_hh, b_ih, b_hh):
    T, B, _ = x.shape
    H = w_hh.shape[1]

    def step(carry, x_t):
        h, c = carry
        gates = x_t @ w_ih.T + b_ih + h @ w_hh.T + b_hh
        i = jax.nn.sigmoid(gates[:, 0 * H:1 * H])
        f = jax.nn.sigmoid(gates[:, 1 * H:2 * H])
        g = jnp.tanh(gates[:, 2 * H:3 * H])
        o = jax.nn.sigmoid(gates[:, 3 * H:4 * H])
        c = f * c + i * g
        h = o * jnp.tanh(c)
        return (h, c), h

    init = (jnp.zeros((B, H), jnp.float32), jnp.zeros((B, H), jnp.float32))
    _, ys = jax.lax.scan(step, init, x)
    return ys


def rnn_forward_ref(x, params):
    h = x
    for (w_ih, w_hh, b_ih, b_hh) in params["lstm"]:
        h = lstm_layer_ref(h, w_ih, w_hh, b_ih, b_hh)
    T, B, H = h.shape
    w_out, b_out = params["out"]
    out = h.reshape(T * B, H) @ w_out.T + b_out
    return out.reshape(T, B, -1)


# ----------------------------------- Main --------------------------------------
if __name__ == "__main__":
    LSTM_NUM = 2        # number of stacked LSTM layers
    HIDDEN = 32         # hitten_num
    IN_CH = 16          # input_channel
    OUT_CH = 8          # output_channel
    T, B = 8, 4         # seq_len, batch

    key = jax.random.PRNGKey(0)
    key, kx = jax.random.split(key)
    x = jax.random.normal(kx, (T, B, IN_CH), jnp.float32)
    params = init_params(key, LSTM_NUM, HIDDEN, IN_CH, OUT_CH)

    out = rnn_forward(x, params)
    out = jax.block_until_ready(out)

    ref = rnn_forward_ref(x, params)
    assert out.shape == (T, B, OUT_CH)
    assert jnp.allclose(out, ref, atol=1e-5, rtol=1e-5), "mismatch vs reference"

    print("KERNEL_OK")
</pallas_src>

<mosaic_0001>
module attributes {stable_mosaic.version = 11 : i64} {
  func.func @kernel(%arg0: memref<32x16xf32, #tpu.memory_space<vmem>>, %arg1: memref<16x128xf32, #tpu.memory_space<vmem>>, %arg2: memref<32x128xf32, #tpu.memory_space<vmem>>, %arg3: memref<1x128xf32, #tpu.memory_space<vmem>>, %arg4: memref<32x128xf32, #tpu.memory_space<vmem>>, %arg5: memref<32x128xf32, #tpu.memory_space<vmem>>, %arg6: memref<1x128xf32, #tpu.memory_space<vmem>>, %arg7: memref<32x8xf32, #tpu.memory_space<vmem>>, %arg8: memref<1x8xf32, #tpu.memory_space<vmem>>, %arg9: memref<32x8xf32, #tpu.memory_space<vmem>>, %arg10: memref<32x32xf32, #tpu.memory_space<vmem>>) attributes {dimension_semantics = [], scalar_prefetch = 0 : i64, scratch_operands = 1 : i64, tpu.core_type = #tpu.core_type<tc>} {
    %c0 = arith.constant 0 : index
    %c0_0 = arith.constant 0 : index
    %0 = vector.load %arg0[%c0, %c0_0] : memref<32x16xf32, #tpu.memory_space<vmem>>, vector<32x16xf32>
    %c0_1 = arith.constant 0 : index
    %c0_2 = arith.constant 0 : index
    %1 = vector.load %arg1[%c0_1, %c0_2] : memref<16x128xf32, #tpu.memory_space<vmem>>, vector<16x128xf32>
    %cst = arith.constant dense<0.000000e+00> : vector<32x128xf32>
    %2 = tpu.matmul %0, %1, %cst {dimension_numbers = #tpu.dot_dimension_numbers<[1], [0], [0], [1], [0, 0, 1, 1], [], []>} : vector<32x16xf32>, vector<16x128xf32>, vector<32x128xf32> -> vector<32x128xf32>
    %c0_3 = arith.constant 0 : index
    %c0_4 = arith.constant 0 : index
    %3 = vector.load %arg3[%c0_3, %c0_4] : memref<1x128xf32, #tpu.memory_space<vmem>>, vector<1x128xf32>
    %4 = vector.broadcast %3 : vector<1x128xf32> to vector<32x128xf32>
    %5 = arith.addf %2, %4 : vector<32x128xf32>
    %c0_5 = arith.constant 0 : index
    %c0_6 = arith.constant 0 : index
    %6 = vector.load %arg2[%c0_5, %c0_6] : memref<32x128xf32, #tpu.memory_space<vmem>>, vector<32x128xf32>
    %cst_7 = arith.constant 0.000000e+00 : f32
    %7 = vector.broadcast %cst_7 : f32 to vector<4x32xf32>
    %cst_8 = arith.constant 0.000000e+00 : f32
    %8 = vector.broadcast %cst_8 : f32 to vector<4x32xf32>
    %9 = vector.extract_strided_slice %5 {offsets = [0, 0], sizes = [4, 128], strides = [1, 1]} : vector<32x128xf32> to vector<4x128xf32>
    %cst_9 = arith.constant dense<0.000000e+00> : vector<4x128xf32>
    %10 = tpu.matmul %7, %6, %cst_9 {dimension_numbers = #tpu.dot_dimension_numbers<[1], [0], [0], [1], [0, 0, 1, 1], [], []>} : vector<4x32xf32>, vector<32x128xf32>, vector<4x128xf32> -> vector<4x128xf32>
    %11 = arith.addf %9, %10 : vector<4x128xf32>
    %12 = vector.extract_strided_slice %11 {offsets = [0, 0], sizes = [4, 32], strides = [1, 1]} : vector<4x128xf32> to vector<4x32xf32>
    %13 = arith.negf %12 : vector<4x32xf32>
    %14 = math.exp %13 : vector<4x32xf32>
    %cst_10 = arith.constant 1.000000e+00 : f32
    %15 = vector.broadcast %cst_10 : f32 to vector<4x32xf32>
    %16 = arith.addf %15, %14 : vector<4x32xf32>
    %17 = arith.divf %15, %16 : vector<4x32xf32>
    %18 = vector.extract_strided_slice %11 {offsets = [0, 32], sizes = [4, 32], strides = [1, 1]} : vector<4x128xf32> to vector<4x32xf32>
    %19 = arith.negf %18 : vector<4x32xf32>
    %20 = math.exp %19 : vector<4x32xf32>
    %cst_11 = arith.constant 1.000000e+00 : f32
    %21 = vector.broadcast %cst_11 : f32 to vector<4x32xf32>
    %22 = arith.addf %21, %20 : vector<4x32xf32>
    %23 = arith.divf %21, %22 : vector<4x32xf32>
    %24 = vector.extract_strided_slice %11 {offsets = [0, 64], sizes = [4, 32], strides = [1, 1]} : vector<4x128xf32> to vector<4x32xf32>
    %25 = math.tanh %24 : vector<4x32xf32>
    %26 = vector.extract_strided_slice %11 {offsets = [0, 96], sizes = [4, 32], strides = [1, 1]} : vector<4x128xf32> to vector<4x32xf32>
    %27 = arith.negf %26 : vector<4x32xf32>
    %28 = math.exp %27 : vector<4x32xf32>
    %cst_12 = arith.constant 1.000000e+00 : f32
    %29 = vector.broadcast %cst_12 : f32 to vector<4x32xf32>
    %30 = arith.addf %29, %28 : vector<4x32xf32>
    %31 = arith.divf %29, %30 : vector<4x32xf32>
    %32 = arith.mulf %23, %8 : vector<4x32xf32>
    %33 = arith.mulf %17, %25 : vector<4x32xf32>
    %34 = arith.addf %32, %33 : vector<4x32xf32>
    %35 = math.tanh %34 : vector<4x32xf32>
    %36 = arith.mulf %31, %35 : vector<4x32xf32>
    %c0_13 = arith.constant 0 : index
    %c0_14 = arith.constant 0 : index
    %37 = vector.load %arg10[%c0_13, %c0_14] : memref<32x32xf32, #tpu.memory_space<vmem>>, vector<4x32xf32>
    tpu.vector_store %arg10[%c0_13, %c0_14], %36 {strides = array<i32>} : memref<32x32xf32, #tpu.memory_space<vmem>>, vector<4x32xf32>,
    %38 = vector.extract_strided_slice %5 {offsets = [4, 0], sizes = [4, 128], strides = [1, 1]} : vector<32x128xf32> to vector<4x128xf32>
    %cst_15 = arith.constant dense<0.000000e+00> : vector<4x128xf32>
    %39 = tpu.matmul %36, %6, %cst_15 {dimension_numbers = #tpu.dot_dimension_numbers<[1], [0], [0], [1], [0, 0, 1, 1], [], []>} : vector<4x32xf32>, vector<32x128xf32>, vector<4x128xf32> -> vector<4x128xf32>
    %40 = arith.addf %38, %39 : vector<4x128xf32>
    %41 = vector.extract_strided_slice %40 {offsets = [0, 0], sizes = [4, 32], strides = [1, 1]} : vector<4x128xf32> to vector<4x32xf32>
    %42 = arith.negf %41 : vector<4x32xf32>
    %43 = math.exp %42 : vector<4x32xf32>
    %cst_16 = arith.constant 1.000000e+00 : f32
    %44 = vector.broadcast %cst_16 : f32 to vector<4x32xf32>
    %45 = arith.addf %44, %43 : vector<4x32xf32>
    %46 = arith.divf %44, %45 : vector<4x32xf32>
    %47 = vector.extract_strided_slice %40 {offsets = [0, 32], sizes = [4, 32], strides = [1, 1]} : vector<4x128xf32> to vector<4x32xf32>
    %48 = arith.negf %47 : vector<4x32xf32>
    %49 = math.exp %48 : vector<4x32xf32>
    %cst_17 = arith.constant 1.000000e+00 : f32
    %50 = vector.broadcast %cst_17 : f32 to vector<4x32xf32>
    %51 = arith.addf %50, %49 : vector<4x32xf32>
    %52 = arith.divf %50, %51 : vector<4x32xf32>
    %53 = vector.extract_strided_slice %40 {offsets = [0, 64], sizes = [4, 32], strides = [1, 1]} : vector<4x128xf32> to vector<4x32xf32>
    %54 = math.tanh %53 : vector<4x32xf32>
    %55 = vector.extract_strided_slice %40 {offsets = [0, 96], sizes = [4, 32], strides = [1, 1]} : vector<4x128xf32> to vector<4x32xf32>
    %56 = arith.negf %55 : vector<4x32xf32>
    %57 = math.exp %56 : vector<4x32xf32>
    %cst_18 = arith.constant 1.000000e+00 : f32
    %58 = vector.broadcast %cst_18 : f32 to vector<4x32xf32>
    %59 = arith.addf %58, %57 : vector<4x32xf32>
    %60 = arith.divf %58, %59 : vector<4x32xf32>
    %61 = arith.mulf %52, %34 : vector<4x32xf32>
    %62 = arith.mulf %46, %54 : vector<4x32xf32>
    %63 = arith.addf %61, %62 : vector<4x32xf32>
    %64 = math.tanh %63 : vector<4x32xf32>
    %65 = arith.mulf %60, %64 : vector<4x32xf32>
    %c4 = arith.constant 4 : index
    %c0_19 = arith.constant 0 : index
    %66 = vector.load %arg10[%c4, %c0_19] : memref<32x32xf32, #tpu.memory_space<vmem>>, vector<4x32xf32>
    tpu.vector_store %arg10[%c4, %c0_19], %65 {strides = array<i32>} : memref<32x32xf32, #tpu.memory_space<vmem>>, vector<4x32xf32>,
    %67 = vector.extract_strided_slice %5 {offsets = [8, 0], sizes = [4, 128], strides = [1, 1]} : vector<32x128xf32> to vector<4x128xf32>
    %cst_20 = arith.constant dense<0.000000e+00> : vector<4x128xf32>
    %68 = tpu.matmul %65, %6, %cst_20 {dimension_numbers = #tpu.dot_dimension_numbers<[1], [0], [0], [1], [0, 0, 1, 1], [], []>} : vector<4x32xf32>, vector<32x128xf32>, vector<4x128xf32> -> vector<4x128xf32>
    %69 = arith.addf %67, %68 : vector<4x128xf32>
    %70 = vector.extract_strided_slice %69 {offsets = [0, 0], sizes = [4, 32], strides = [1, 1]} : vector<4x128xf32> to vector<4x32xf32>
    %71 = arith.negf %70 : vector<4x32xf32>
    %72 = math.exp %71 : vector<4x32xf32>
    %cst_21 = arith.constant 1.000000e+00 : f32
    %73 = vector.broadcast %cst_21 : f32 to vector<4x32xf32>
    %74 = arith.addf %73, %72 : vector<4x32xf32>
    %75 = arith.divf %73, %74 : vector<4x32xf32>
    %76 = vector.extract_strided_slice %69 {offsets = [0, 32], sizes = [4, 32], strides = [1, 1]} : vector<4x128xf32> to vector<4x32xf32>
    %77 = arith.negf %76 : vector<4x32xf32>
    %78 = math.exp %77 : vector<4x32xf32>
    %cst_22 = arith.constant 1.000000e+00 : f32
    %79 = vector.broadcast %cst_22 : f32 to vector<4x32xf32>
    %80 = arith.addf %79, %78 : vector<4x32xf32>
    %81 = arith.divf %79, %80 : vector<4x32xf32>
    %82 = vector.extract_strided_slice %69 {offsets = [0, 64], sizes = [4, 32], strides = [1, 1]} : vector<4x128xf32> to vector<4x32xf32>
    %83 = math.tanh %82 : vector<4x32xf32>
    %84 = vector.extract_strided_slice %69 {offsets = [0, 96], sizes = [4, 32], strides = [1, 1]} : vector<4x128xf32> to vector<4x32xf32>
    %85 = arith.negf %84 : vector<4x32xf32>
    %86 = math.exp %85 : vector<4x32xf32>
    %cst_23 = arith.constant 1.000000e+00 : f32
    %87 = vector.broadcast %cst_23 : f32 to vector<4x32xf32>
    %88 = arith.addf %87, %86 : vector<4x32xf32>
    %89 = arith.divf %87, %88 : vector<4x32xf32>
    %90 = arith.mulf %81, %63 : vector<4x32xf32>
    %91 = arith.mulf %75, %83 : vector<4x32xf32>
    %92 = arith.addf %90, %91 : vector<4x32xf32>
    %93 = math.tanh %92 : vector<4x32xf32>
    %94 = arith.mulf %89, %93 : vector<4x32xf32>
    %c8 = arith.constant 8 : index
    %c0_24 = arith.constant 0 : index
    %95 = vector.load %arg10[%c8, %c0_24] : memref<32x32xf32, #tpu.memory_space<vmem>>, vector<4x32xf32>
    tpu.vector_store %arg10[%c8, %c0_24], %94 {strides = array<i32>} : memref<32x32xf32, #tpu.memory_space<vmem>>, vector<4x32xf32>,
    %96 = vector.extract_strided_slice %5 {offsets = [12, 0], sizes = [4, 128], strides = [1, 1]} : vector<32x128xf32> to vector<4x128xf32>
    %cst_25 = arith.constant dense<0.000000e+00> : vector<4x128xf32>
    %97 = tpu.matmul %94, %6, %cst_25 {dimension_numbers = #tpu.dot_dimension_numbers<[1], [0], [0], [1], [0, 0, 1, 1], [], []>} : vector<4x32xf32>, vector<32x128xf32>, vector<4x128xf32> -> vector<4x128xf32>
    %98 = arith.addf %96, %97 : vector<4x128xf32>
    %99 = vector.extract_strided_slice %98 {offsets = [0, 0], sizes = [4, 32], strides = [1, 1]} : vector<4x128xf32> to vector<4x32xf32>
    %100 = arith.negf %99 : vector<4x32xf32>
    %101 = math.exp %100 : vector<4x32xf32>
    %cst_26 = arith.constant 1.000000e+00 : f32
    %102 = vector.broadcast %cst_26 : f32 to vector<4x32xf32>
    %103 = arith.addf %102, %101 : vector<4x32xf32>
    %104 = arith.divf %102, %103 : vector<4x32xf32>
    %105 = vector.extract_strided_slice %98 {offsets = [0, 32], sizes = [4, 32], strides = [1, 1]} : vector<4x128xf32> to vector<4x32xf32>
    %106 = arith.negf %105 : vector<4x32xf32>
    %107 = math.exp %106 : vector<4x32xf32>
    %cst_27 = arith.constant 1.000000e+00 : f32
    %108 = vector.broadcast %cst_27 : f32 to vector<4x32xf32>
    %109 = arith.addf %108, %107 : vector<4x32xf32>
    %110 = arith.divf %108, %109 : vector<4x32xf32>
    %111 = vector.extract_strided_slice %98 {offsets = [0, 64], sizes = [4, 32], strides = [1, 1]} : vector<4x128xf32> to vector<4x32xf32>
    %112 = math.tanh %111 : vector<4x32xf32>
    %113 = vector.extract_strided_slice %98 {offsets = [0, 96], sizes = [4, 32], strides = [1, 1]} : vector<4x128xf32> to vector<4x32xf32>
    %114 = arith.negf %113 : vector<4x32xf32>
    %115 = math.exp %114 : vector<4x32xf32>
    %cst_28 = arith.constant 1.000000e+00 : f32
    %116 = vector.broadcast %cst_28 : f32 to vector<4x32xf32>
    %117 = arith.addf %116, %115 : vector<4x32xf32>
    %118 = arith.divf %116, %117 : vector<4x32xf32>
    %119 = arith.mulf %110, %92 : vector<4x32xf32>
    %120 = arith.mulf %104, %112 : vector<4x32xf32>
    %121 = arith.addf %119, %120 : vector<4x32xf32>
    %122 = math.tanh %121 : vector<4x32xf32>
    %123 = arith.mulf %118, %122 : vector<4x32xf32>
    %c12 = arith.constant 12 : index
    %c0_29 = arith.constant 0 : index
    %124 = vector.load %arg10[%c12, %c0_29] : memref<32x32xf32, #tpu.memory_space<vmem>>, vector<4x32xf32>
    tpu.vector_store %arg10[%c12, %c0_29], %123 {strides = array<i32>} : memref<32x32xf32, #tpu.memory_space<vmem>>, vector<4x32xf32>,
    %125 = vector.extract_strided_slice %5 {offsets = [16, 0], sizes = [4, 128], strides = [1, 1]} : vector<32x128xf32> to vector<4x128xf32>
    %cst_30 = arith.constant dense<0.000000e+00> : vector<4x128xf32>
    %126 = tpu.matmul %123, %6, %cst_30 {dimension_numbers = #tpu.dot_dimension_numbers<[1], [0], [0], [1], [0, 0, 1, 1], [], []>} : vector<4x32xf32>, vector<32x128xf32>, vector<4x128xf32> -> vector<4x128xf32>
    %127 = arith.addf %125, %126 : vector<4x128xf32>
    %128 = vector.extract_strided_slice %127 {offsets = [0, 0], sizes = [4, 32], strides = [1, 1]} : vector<4x128xf32> to vector<4x32xf32>
    %129 = arith.negf %128 : vector<4x32xf32>
    %130 = math.exp %129 : vector<4x32xf32>
    %cst_31 = arith.constant 1.000000e+00 : f32
    %131 = vector.broadcast %cst_31 : f32 to vector<4x32xf32>
    %132 = arith.addf %131, %130 : vector<4x32xf32>
    %133 = arith.divf %131, %132 : vector<4x32xf32>
    %134 = vector.extract_strided_slice %127 {offsets = [0, 32], sizes = [4, 32], strides = [1, 1]} : vector<4x128xf32> to vector<4x32xf32>
    %135 = arith.negf %134 : vector<4x32xf32>
    %136 = math.exp %135 : vector<4x32xf32>
    %cst_32 = arith.constant 1.000000e+00 : f32
    %137 = vector.broadcast %cst_32 : f32 to vector<4x32xf32>
    %138 = arith.addf %137, %136 : vector<4x32xf32>
    %139 = arith.divf %137, %138 : vector<4x32xf32>
    %140 = vector.extract_strided_slice %127 {offsets = [0, 64], sizes = [4, 32], strides = [1, 1]} : vector<4x128xf32> to vector<4x32xf32>
    %141 = math.tanh %140 : vector<4x32xf32>
    %142 = vector.extract_strided_slice %127 {offsets = [0, 96], sizes = [4, 32], strides = [1, 1]} : vector<4x128xf32> to vector<4x32xf32>
    %143 = arith.negf %142 : vector<4x32xf32>
    %144 = math.exp %143 : vector<4x32xf32>
    %cst_33 = arith.constant 1.000000e+00 : f32
    %145 = vector.broadcast %cst_33 : f32 to vector<4x32xf32>
    %146 = arith.addf %145, %144 : vector<4x32xf32>
    %147 = arith.divf %145, %146 : vector<4x32xf32>
    %148 = arith.mulf %139, %121 : vector<4x32xf32>
    %149 = arith.mulf %133, %141 : vector<4x32xf32>
    %150 = arith.addf %148, %149 : vector<4x32xf32>
    %151 = math.tanh %150 : vector<4x32xf32>
    %152 = arith.mulf %147, %151 : vector<4x32xf32>
    %c16 = arith.constant 16 : index
    %c0_34 = arith.constant 0 : index
    %153 = vector.load %arg10[%c16, %c0_34] : memref<32x32xf32, #tpu.memory_space<vmem>>, vector<4x32xf32>
    tpu.vector_store %arg10[%c16, %c0_34], %152 {strides = array<i32>} : memref<32x32xf32, #tpu.memory_space<vmem>>, vector<4x32xf32>,
    %154 = vector.extract_strided_slice %5 {offsets = [20, 0], sizes = [4, 128], strides = [1, 1]} : vector<32x128xf32> to vector<4x128xf32>
    %cst_35 = arith.constant dense<0.000000e+00> : vector<4x128xf32>
    %155 = tpu.matmul %152, %6, %cst_35 {dimension_numbers = #tpu.dot_dimension_numbers<[1], [0], [0], [1], [0, 0, 1, 1], [], []>} : vector<4x32xf32>, vector<32x128xf32>, vector<4x128xf32> -> vector<4x128xf32>
    %156 = arith.addf %154, %155 : vector<4x128xf32>
    %157 = vector.extract_strided_slice %156 {offsets = [0, 0], sizes = [4, 32], strides = [1, 1]} : vector<4x128xf32> to vector<4x32xf32>
    %158 = arith.negf %157 : vector<4x32xf32>
    %159 = math.exp %158 : vector<4x32xf32>
    %cst_36 = arith.constant 1.000000e+00 : f32
    %160 = vector.broadcast %cst_36 : f32 to vector<4x32xf32>
    %161 = arith.addf %160, %159 : vector<4x32xf32>
    %162 = arith.divf %160, %161 : vector<4x32xf32>
    %163 = vector.extract_strided_slice %156 {offsets = [0, 32], sizes = [4, 32], strides = [1, 1]} : vector<4x128xf32> to vector<4x32xf32>
    %164 = arith.negf %163 : vector<4x32xf32>
    %165 = math.exp %164 : vector<4x32xf32>
    %cst_37 = arith.constant 1.000000e+00 : f32
    %166 = vector.broadcast %cst_37 : f32 to vector<4x32xf32>
    %167 = arith.addf %166, %165 : vector<4x32xf32>
    %168 = arith.divf %166, %167 : vector<4x32xf32>
    %169 = vector.extract_strided_slice %156 {offsets = [0, 64], sizes = [4, 32], strides = [1, 1]} : vector<4x128xf32> to vector<4x32xf32>
    %170 = math.tanh %169 : vector<4x32xf32>
    %171 = vector.extract_strided_slice %156 {offsets = [0, 96], sizes = [4, 32], strides = [1, 1]} : vector<4x128xf32> to vector<4x32xf32>
    %172 = arith.negf %171 : vector<4x32xf32>
    %173 = math.exp %172 : vector<4x32xf32>
    %cst_38 = arith.constant 1.000000e+00 : f32
    %174 = vector.broadcast %cst_38 : f32 to vector<4x32xf32>
    %175 = arith.addf %174, %173 : vector<4x32xf32>
    %176 = arith.divf %174, %175 : vector<4x32xf32>
    %177 = arith.mulf %168, %150 : vector<4x32xf32>
    %178 = arith.mulf %162, %170 : vector<4x32xf32>
    %179 = arith.addf %177, %178 : vector<4x32xf32>
    %180 = math.tanh %179 : vector<4x32xf32>
    %181 = arith.mulf %176, %180 : vector<4x32xf32>
    %c20 = arith.constant 20 : index
    %c0_39 = arith.constant 0 : index
    %182 = vector.load %arg10[%c20, %c0_39] : memref<32x32xf32, #tpu.memory_space<vmem>>, vector<4x32xf32>
    tpu.vector_store %arg10[%c20, %c0_39], %181 {strides = array<i32>} : memref<32x32xf32, #tpu.memory_space<vmem>>, vector<4x32xf32>,
    %183 = vector.extract_strided_slice %5 {offsets = [24, 0], sizes = [4, 128], strides = [1, 1]} : vector<32x128xf32> to vector<4x128xf32>
    %cst_40 = arith.constant dense<0.000000e+00> : vector<4x128xf32>
    %184 = tpu.matmul %181, %6, %cst_40 {dimension_numbers = #tpu.dot_dimension_numbers<[1], [0], [0], [1], [0, 0, 1, 1], [], []>} : vector<4x32xf32>, vector<32x128xf32>, vector<4x128xf32> -> vector<4x128xf32>
    %185 = arith.addf %183, %184 : vector<4x128xf32>
    %186 = vector.extract_strided_slice %185 {offsets = [0, 0], sizes = [4, 32], strides = [1, 1]} : vector<4x128xf32> to vector<4x32xf32>
    %187 = arith.negf %186 : vector<4x32xf32>
    %188 = math.exp %187 : vector<4x32xf32>
    %cst_41 = arith.constant 1.000000e+00 : f32
    %189 = vector.broadcast %cst_41 : f32 to vector<4x32xf32>
    %190 = arith.addf %189, %188 : vector<4x32xf32>
    %191 = arith.divf %189, %190 : vector<4x32xf32>
    %192 = vector.extract_strided_slice %185 {offsets = [0, 32], sizes = [4, 32], strides = [1, 1]} : vector<4x128xf32> to vector<4x32xf32>
    %193 = arith.negf %192 : vector<4x32xf32>
    %194 = math.exp %193 : vector<4x32xf32>
    %cst_42 = arith.constant 1.000000e+00 : f32
    %195 = vector.broadcast %cst_42 : f32 to vector<4x32xf32>
    %196 = arith.addf %195, %194 : vector<4x32xf32>
    %197 = arith.divf %195, %196 : vector<4x32xf32>
    %198 = vector.extract_strided_slice %185 {offsets = [0, 64], sizes = [4, 32], strides = [1, 1]} : vector<4x128xf32> to vector<4x32xf32>
    %199 = math.tanh %198 : vector<4x32xf32>
    %200 = vector.extract_strided_slice %185 {offsets = [0, 96], sizes = [4, 32], strides = [1, 1]} : vector<4x128xf32> to vector<4x32xf32>
    %201 = arith.negf %200 : vector<4x32xf32>
    %202 = math.exp %201 : vector<4x32xf32>
    %cst_43 = arith.constant 1.000000e+00 : f32
    %203 = vector.broadcast %cst_43 : f32 to vector<4x32xf32>
    %204 = arith.addf %203, %202 : vector<4x32xf32>
    %205 = arith.divf %203, %204 : vector<4x32xf32>
    %206 = arith.mulf %197, %179 : vector<4x32xf32>
    %207 = arith.mulf %191, %199 : vector<4x32xf32>
    %208 = arith.addf %206, %207 : vector<4x32xf32>
    %209 = math.tanh %208 : vector<4x32xf32>
    %210 = arith.mulf %205, %209 : vector<4x32xf32>
    %c24 = arith.constant 24 : index
    %c0_44 = arith.constant 0 : index
    %211 = vector.load %arg10[%c24, %c0_44] : memref<32x32xf32, #tpu.memory_space<vmem>>, vector<4x32xf32>
    tpu.vector_store %arg10[%c24, %c0_44], %210 {strides = array<i32>} : memref<32x32xf32, #tpu.memory_space<vmem>>, vector<4x32xf32>,
    %212 = vector.extract_strided_slice %5 {offsets = [28, 0], sizes = [4, 128], strides = [1, 1]} : vector<32x128xf32> to vector<4x128xf32>
    %cst_45 = arith.constant dense<0.000000e+00> : vector<4x128xf32>
    %213 = tpu.matmul %210, %6, %cst_45 {dimension_numbers = #tpu.dot_dimension_numbers<[1], [0], [0], [1], [0, 0, 1, 1], [], []>} : vector<4x32xf32>, vector<32x128xf32>, vector<4x128xf32> -> vector<4x128xf32>
    %214 = arith.addf %212, %213 : vector<4x128xf32>
    %215 = vector.extract_strided_slice %214 {offsets = [0, 0], sizes = [4, 32], strides = [1, 1]} : vector<4x128xf32> to vector<4x32xf32>
    %216 = arith.negf %215 : vector<4x32xf32>
    %217 = math.exp %216 : vector<4x32xf32>
    %cst_46 = arith.constant 1.000000e+00 : f32
    %218 = vector.broadcast %cst_46 : f32 to vector<4x32xf32>
    %219 = arith.addf %218, %217 : vector<4x32xf32>
    %220 = arith.divf %218, %219 : vector<4x32xf32>
    %221 = vector.extract_strided_slice %214 {offsets = [0, 32], sizes = [4, 32], strides = [1, 1]} : vector<4x128xf32> to vector<4x32xf32>
    %222 = arith.negf %221 : vector<4x32xf32>
    %223 = math.exp %222 : vector<4x32xf32>
    %cst_47 = arith.constant 1.000000e+00 : f32
    %224 = vector.broadcast %cst_47 : f32 to vector<4x32xf32>
    %225 = arith.addf %224, %223 : vector<4x32xf32>
    %226 = arith.divf %224, %225 : vector<4x32xf32>
    %227 = vector.extract_strided_slice %214 {offsets = [0, 64], sizes = [4, 32], strides = [1, 1]} : vector<4x128xf32> to vector<4x32xf32>
    %228 = math.tanh %227 : vector<4x32xf32>
    %229 = vector.extract_strided_slice %214 {offsets = [0, 96], sizes = [4, 32], strides = [1, 1]} : vector<4x128xf32> to vector<4x32xf32>
    %230 = arith.negf %229 : vector<4x32xf32>
    %231 = math.exp %230 : vector<4x32xf32>
    %cst_48 = arith.constant 1.000000e+00 : f32
    %232 = vector.broadcast %cst_48 : f32 to vector<4x32xf32>
    %233 = arith.addf %232, %231 : vector<4x32xf32>
    %234 = arith.divf %232, %233 : vector<4x32xf32>
    %235 = arith.mulf %226, %208 : vector<4x32xf32>
    %236 = arith.mulf %220, %228 : vector<4x32xf32>
    %237 = arith.addf %235, %236 : vector<4x32xf32>
    %238 = math.tanh %237 : vector<4x32xf32>
    %239 = arith.mulf %234, %238 : vector<4x32xf32>
    %c28 = arith.constant 28 : index
    %c0_49 = arith.constant 0 : index
    %240 = vector.load %arg10[%c28, %c0_49] : memref<32x32xf32, #tpu.memory_space<vmem>>, vector<4x32xf32>
    tpu.vector_store %arg10[%c28, %c0_49], %239 {strides = array<i32>} : memref<32x32xf32, #tpu.memory_space<vmem>>, vector<4x32xf32>,
    %c0_50 = arith.constant 0 : index
    %c0_51 = arith.constant 0 : index
    %241 = vector.load %arg10[%c0_50, %c0_51] : memref<32x32xf32, #tpu.memory_space<vmem>>, vector<32x32xf32>
    %c0_52 = arith.constant 0 : index
    %c0_53 = arith.constant 0 : index
    %242 = vector.load %arg4[%c0_52, %c0_53] : memref<32x128xf32, #tpu.memory_space<vmem>>, vector<32x128xf32>
    %cst_54 = arith.constant dense<0.000000e+00> : vector<32x128xf32>
    %243 = tpu.matmul %241, %242, %cst_54 {dimension_numbers = #tpu.dot_dimension_numbers<[1], [0], [0], [1], [0, 0, 1, 1], [], []>} : vector<32x32xf32>, vector<32x128xf32>, vector<32x128xf32> -> vector<32x128xf32>
    %c0_55 = arith.constant 0 : index
    %c0_56 = arith.constant 0 : index
    %244 = vector.load %arg6[%c0_55, %c0_56] : memref<1x128xf32, #tpu.memory_space<vmem>>, vector<1x128xf32>
    %245 = vector.broadcast %244 : vector<1x128xf32> to vector<32x128xf32>
    %246 = arith.addf %243, %245 : vector<32x128xf32>
    %c0_57 = arith.constant 0 : index
    %c0_58 = arith.constant 0 : index
    %247 = vector.load %arg5[%c0_57, %c0_58] : memref<32x128xf32, #tpu.memory_space<vmem>>, vector<32x128xf32>
    %cst_59 = arith.constant 0.000000e+00 : f32
    %248 = vector.broadcast %cst_59 : f32 to vector<4x32xf32>
    %cst_60 = arith.constant 0.000000e+00 : f32
    %249 = vector.broadcast %cst_60 : f32 to vector<4x32xf32>
    %250 = vector.extract_strided_slice %246 {offsets = [0, 0], sizes = [4, 128], strides = [1, 1]} : vector<32x128xf32> to vector<4x128xf32>
    %cst_61 = arith.constant dense<0.000000e+00> : vector<4x128xf32>
    %251 = tpu.matmul %248, %247, %cst_61 {dimension_numbers = #tpu.dot_dimension_numbers<[1], [0], [0], [1], [0, 0, 1, 1], [], []>} : vector<4x32xf32>, vector<32x128xf32>, vector<4x128xf32> -> vector<4x128xf32>
    %252 = arith.addf %250, %251 : vector<4x128xf32>
    %253 = vector.extract_strided_slice %252 {offsets = [0, 0], sizes = [4, 32], strides = [1, 1]} : vector<4x128xf32> to vector<4x32xf32>
    %254 = arith.negf %253 : vector<4x32xf32>
    %255 = math.exp %254 : vector<4x32xf32>
    %cst_62 = arith.constant 1.000000e+00 : f32
    %256 = vector.broadcast %cst_62 : f32 to vector<4x32xf32>
    %257 = arith.addf %256, %255 : vector<4x32xf32>
    %258 = arith.divf %256, %257 : vector<4x32xf32>
    %259 = vector.extract_strided_slice %252 {offsets = [0, 32], sizes = [4, 32], strides = [1, 1]} : vector<4x128xf32> to vector<4x32xf32>
    %260 = arith.negf %259 : vector<4x32xf32>
    %261 = math.exp %260 : vector<4x32xf32>
    %cst_63 = arith.constant 1.000000e+00 : f32
    %262 = vector.broadcast %cst_63 : f32 to vector<4x32xf32>
    %263 = arith.addf %262, %261 : vector<4x32xf32>
    %264 = arith.divf %262, %263 : vector<4x32xf32>
    %265 = vector.extract_strided_slice %252 {offsets = [0, 64], sizes = [4, 32], strides = [1, 1]} : vector<4x128xf32> to vector<4x32xf32>
    %266 = math.tanh %265 : vector<4x32xf32>
    %267 = vector.extract_strided_slice %252 {offsets = [0, 96], sizes = [4, 32], strides = [1, 1]} : vector<4x128xf32> to vector<4x32xf32>
    %268 = arith.negf %267 : vector<4x32xf32>
    %269 = math.exp %268 : vector<4x32xf32>
    %cst_64 = arith.constant 1.000000e+00 : f32
    %270 = vector.broadcast %cst_64 : f32 to vector<4x32xf32>
    %271 = arith.addf %270, %269 : vector<4x32xf32>
    %272 = arith.divf %270, %271 : vector<4x32xf32>
    %273 = arith.mulf %264, %249 : vector<4x32xf32>
    %274 = arith.mulf %258, %266 : vector<4x32xf32>
    %275 = arith.addf %273, %274 : vector<4x32xf32>
    %276 = math.tanh %275 : vector<4x32xf32>
    %277 = arith.mulf %272, %276 : vector<4x32xf32>
    %c0_65 = arith.constant 0 : index
    %c0_66 = arith.constant 0 : index
    %278 = vector.load %arg10[%c0_65, %c0_66] : memref<32x32xf32, #tpu.memory_space<vmem>>, vector<4x32xf32>
    tpu.vector_store %arg10[%c0_65, %c0_66], %277 {strides = array<i32>} : memref<32x32xf32, #tpu.memory_space<vmem>>, vector<4x32xf32>,
    %279 = vector.extract_strided_slice %246 {offsets = [4, 0], sizes = [4, 128], strides = [1, 1]} : vector<32x128xf32> to vector<4x128xf32>
    %cst_67 = arith.constant dense<0.000000e+00> : vector<4x128xf32>
    %280 = tpu.matmul %277, %247, %cst_67 {dimension_numbers = #tpu.dot_dimension_numbers<[1], [0], [0], [1], [0, 0, 1, 1], [], []>} : vector<4x32xf32>, vector<32x128xf32>, vector<4x128xf32> -> vector<4x128xf32>
    %281 = arith.addf %279, %280 : vector<4x128xf32>
    %282 = vector.extract_strided_slice %281 {offsets = [0, 0], sizes = [4, 32], strides = [1, 1]} : vector<4x128xf32> to vector<4x32xf32>
    %283 = arith.negf %282 : vector<4x32xf32>
    %284 = math.exp %283 : vector<4x32xf32>
    %cst_68 = arith.constant 1.000000e+00 : f32
    %285 = vector.broadcast %cst_68 : f32 to vector<4x32xf32>
    %286 = arith.addf %285, %284 : vector<4x32xf32>
    %287 = arith.divf %285, %286 : vector<4x32xf32>
    %288 = vector.extract_strided_slice %281 {offsets = [0, 32], sizes = [4, 32], strides = [1, 1]} : vector<4x128xf32> to vector<4x32xf32>
    %289 = arith.negf %288 : vector<4x32xf32>
    %290 = math.exp %289 : vector<4x32xf32>
    %cst_69 = arith.constant 1.000000e+00 : f32
    %291 = vector.broadcast %cst_69 : f32 to vector<4x32xf32>
    %292 = arith.addf %291, %290 : vector<4x32xf32>
    %293 = arith.divf %291, %292 : vector<4x32xf32>
    %294 = vector.extract_strided_slice %281 {offsets = [0, 64], sizes = [4, 32], strides = [1, 1]} : vector<4x128xf32> to vector<4x32xf32>
    %295 = math.tanh %294 : vector<4x32xf32>
    %296 = vector.extract_strided_slice %281 {offsets = [0, 96], sizes = [4, 32], strides = [1, 1]} : vector<4x128xf32> to vector<4x32xf32>
    %297 = arith.negf %296 : vector<4x32xf32>
    %298 = math.exp %297 : vector<4x32xf32>
    %cst_70 = arith.constant 1.000000e+00 : f32
    %299 = vector.broadcast %cst_70 : f32 to vector<4x32xf32>
    %300 = arith.addf %299, %298 : vector<4x32xf32>
    %301 = arith.divf %299, %300 : vector<4x32xf32>
    %302 = arith.mulf %293, %275 : vector<4x32xf32>
    %303 = arith.mulf %287, %295 : vector<4x32xf32>
    %304 = arith.addf %302, %303 : vector<4x32xf32>
    %305 = math.tanh %304 : vector<4x32xf32>
    %306 = arith.mulf %301, %305 : vector<4x32xf32>
    %c4_71 = arith.constant 4 : index
    %c0_72 = arith.constant 0 : index
    %307 = vector.load %arg10[%c4_71, %c0_72] : memref<32x32xf32, #tpu.memory_space<vmem>>, vector<4x32xf32>
    tpu.vector_store %arg10[%c4_71, %c0_72], %306 {strides = array<i32>} : memref<32x32xf32, #tpu.memory_space<vmem>>, vector<4x32xf32>,
    %308 = vector.extract_strided_slice %246 {offsets = [8, 0], sizes = [4, 128], strides = [1, 1]} : vector<32x128xf32> to vector<4x128xf32>
    %cst_73 = arith.constant dense<0.000000e+00> : vector<4x128xf32>
    %309 = tpu.matmul %306, %247, %cst_73 {dimension_numbers = #tpu.dot_dimension_numbers<[1], [0], [0], [1], [0, 0, 1, 1], [], []>} : vector<4x32xf32>, vector<32x128xf32>, vector<4x128xf32> -> vector<4x128xf32>
    %310 = arith.addf %308, %309 : vector<4x128xf32>
    %311 = vector.extract_strided_slice %310 {offsets = [0, 0], sizes = [4, 32], strides = [1, 1]} : vector<4x128xf32> to vector<4x32xf32>
    %312 = arith.negf %311 : vector<4x32xf32>
    %313 = math.exp %312 : vector<4x32xf32>
    %cst_74 = arith.constant 1.000000e+00 : f32
    %314 = vector.broadcast %cst_74 : f32 to vector<4x32xf32>
    %315 = arith.addf %314, %313 : vector<4x32xf32>
    %316 = arith.divf %314, %315 : vector<4x32xf32>
    %317 = vector.extract_strided_slice %310 {offsets = [0, 32], sizes = [4, 32], strides = [1, 1]} : vector<4x128xf32> to vector<4x32xf32>
    %318 = arith.negf %317 : vector<4x32xf32>
    %319 = math.exp %318 : vector<4x32xf32>
    %cst_75 = arith.constant 1.000000e+00 : f32
    %320 = vector.broadcast %cst_75 : f32 to vector<4x32xf32>
    %321 = arith.addf %320, %319 : vector<4x32xf32>
    %322 = arith.divf %320, %321 : vector<4x32xf32>
    %323 = vector.extract_strided_slice %310 {offsets = [0, 64], sizes = [4, 32], strides = [1, 1]} : vector<4x128xf32> to vector<4x32xf32>
    %324 = math.tanh %323 : vector<4x32xf32>
    %325 = vector.extract_strided_slice %310 {offsets = [0, 96], sizes = [4, 32], strides = [1, 1]} : vector<4x128xf32> to vector<4x32xf32>
    %326 = arith.negf %325 : vector<4x32xf32>
    %327 = math.exp %326 : vector<4x32xf32>
    %cst_76 = arith.constant 1.000000e+00 : f32
    %328 = vector.broadcast %cst_76 : f32 to vector<4x32xf32>
    %329 = arith.addf %328, %327 : vector<4x32xf32>
    %330 = arith.divf %328, %329 : vector<4x32xf32>
    %331 = arith.mulf %322, %304 : vector<4x32xf32>
    %332 = arith.mulf %316, %324 : vector<4x32xf32>
    %333 = arith.addf %331, %332 : vector<4x32xf32>
    %334 = math.tanh %333 : vector<4x32xf32>
    %335 = arith.mulf %330, %334 : vector<4x32xf32>
    %c8_77 = arith.constant 8 : index
    %c0_78 = arith.constant 0 : index
    %336 = vector.load %arg10[%c8_77, %c0_78] : memref<32x32xf32, #tpu.memory_space<vmem>>, vector<4x32xf32>
    tpu.vector_store %arg10[%c8_77, %c0_78], %335 {strides = array<i32>} : memref<32x32xf32, #tpu.memory_space<vmem>>, vector<4x32xf32>,
    %337 = vector.extract_strided_slice %246 {offsets = [12, 0], sizes = [4, 128], strides = [1, 1]} : vector<32x128xf32> to vector<4x128xf32>
    %cst_79 = arith.constant dense<0.000000e+00> : vector<4x128xf32>
    %338 = tpu.matmul %335, %247, %cst_79 {dimension_numbers = #tpu.dot_dimension_numbers<[1], [0], [0], [1], [0, 0, 1, 1], [], []>} : vector<4x32xf32>, vector<32x128xf32>, vector<4x128xf32> -> vector<4x128xf32>
    %339 = arith.addf %337, %338 : vector<4x128xf32>
    %340 = vector.extract_strided_slice %339 {offsets = [0, 0], sizes = [4, 32], strides = [1, 1]} : vector<4x128xf32> to vector<4x32xf32>
    %341 = arith.negf %340 : vector<4x32xf32>
    %342 = math.exp %341 : vector<4x32xf32>
    %cst_80 = arith.constant 1.000000e+00 : f32
    %343 = vector.broadcast %cst_80 : f32 to vector<4x32xf32>
    %344 = arith.addf %343, %342 : vector<4x32xf32>
    %345 = arith.divf %343, %344 : vector<4x32xf32>
    %346 = vector.extract_strided_slice %339 {offsets = [0, 32], sizes = [4, 32], strides = [1, 1]} : vector<4x128xf32> to vector<4x32xf32>
    %347 = arith.negf %346 : vector<4x32xf32>
    %348 = math.exp %347 : vector<4x32xf32>
    %cst_81 = arith.constant 1.000000e+00 : f32
    %349 = vector.broadcast %cst_81 : f32 to vector<4x32xf32>
    %350 = arith.addf %349, %348 : vector<4x32xf32>
    %351 = arith.divf %349, %350 : vector<4x32xf32>
    %352 = vector.extract_strided_slice %339 {offsets = [0, 64], sizes = [4, 32], strides = [1, 1]} : vector<4x128xf32> to vector<4x32xf32>
    %353 = math.tanh %352 : vector<4x32xf32>
    %354 = vector.extract_strided_slice %339 {offsets = [0, 96], sizes = [4, 32], strides = [1, 1]} : vector<4x128xf32> to vector<4x32xf32>
    %355 = arith.negf %354 : vector<4x32xf32>
    %356 = math.exp %355 : vector<4x32xf32>
    %cst_82 = arith.constant 1.000000e+00 : f32
    %357 = vector.broadcast %cst_82 : f32 to vector<4x32xf32>
    %358 = arith.addf %357, %356 : vector<4x32xf32>
    %359 = arith.divf %357, %358 : vector<4x32xf32>
    %360 = arith.mulf %351, %333 : vector<4x32xf32>
    %361 = arith.mulf %345, %353 : vector<4x32xf32>
    %362 = arith.addf %360, %361 : vector<4x32xf32>
    %363 = math.tanh %362 : vector<4x32xf32>
    %364 = arith.mulf %359, %363 : vector<4x32xf32>
    %c12_83 = arith.constant 12 : index
    %c0_84 = arith.constant 0 : index
    %365 = vector.load %arg10[%c12_83, %c0_84] : memref<32x32xf32, #tpu.memory_space<vmem>>, vector<4x32xf32>
    tpu.vector_store %arg10[%c12_83, %c0_84], %364 {strides = array<i32>} : memref<32x32xf32, #tpu.memory_space<vmem>>, vector<4x32xf32>,
    %366 = vector.extract_strided_slice %246 {offsets = [16, 0], sizes = [4, 128], strides = [1, 1]} : vector<32x128xf32> to vector<4x128xf32>
    %cst_85 = arith.constant dense<0.000000e+00> : vector<4x128xf32>
    %367 = tpu.matmul %364, %247, %cst_85 {dimension_numbers = #tpu.dot_dimension_numbers<[1], [0], [0], [1], [0, 0, 1, 1], [], []>} : vector<4x32xf32>, vector<32x128xf32>, vector<4x128xf32> -> vector<4x128xf32>
    %368 = arith.addf %366, %367 : vector<4x128xf32>
    %369 = vector.extract_strided_slice %368 {offsets = [0, 0], sizes = [4, 32], strides = [1, 1]} : vector<4x128xf32> to vector<4x32xf32>
    %370 = arith.negf %369 : vector<4x32xf32>
    %371 = math.exp %370 : vector<4x32xf32>
    %cst_86 = arith.constant 1.000000e+00 : f32
    %372 = vector.broadcast %cst_86 : f32 to vector<4x32xf32>
    %373 = arith.addf %372, %371 : vector<4x32xf32>
    %374 = arith.divf %372, %373 : vector<4x32xf32>
    %375 = vector.extract_strided_slice %368 {offsets = [0, 32], sizes = [4, 32], strides = [1, 1]} : vector<4x128xf32> to vector<4x32xf32>
    %376 = arith.negf %375 : vector<4x32xf32>
    %377 = math.exp %376 : vector<4x32xf32>
    %cst_87 = arith.constant 1.000000e+00 : f32
    %378 = vector.broadcast %cst_87 : f32 to vector<4x32xf32>
    %379 = arith.addf %378, %377 : vector<4x32xf32>
    %380 = arith.divf %378, %379 : vector<4x32xf32>
    %381 = vector.extract_strided_slice %368 {offsets = [0, 64], sizes = [4, 32], strides = [1, 1]} : vector<4x128xf32> to vector<4x32xf32>
    %382 = math.tanh %381 : vector<4x32xf32>
    %383 = vector.extract_strided_slice %368 {offsets = [0, 96], sizes = [4, 32], strides = [1, 1]} : vector<4x128xf32> to vector<4x32xf32>
    %384 = arith.negf %383 : vector<4x32xf32>
    %385 = math.exp %384 : vector<4x32xf32>
    %cst_88 = arith.constant 1.000000e+00 : f32
    %386 = vector.broadcast %cst_88 : f32 to vector<4x32xf32>
    %387 = arith.addf %386, %385 : vector<4x32xf32>
    %388 = arith.divf %386, %387 : vector<4x32xf32>
    %389 = arith.mulf %380, %362 : vector<4x32xf32>
    %390 = arith.mulf %374, %382 : vector<4x32xf32>
    %391 = arith.addf %389, %390 : vector<4x32xf32>
    %392 = math.tanh %391 : vector<4x32xf32>
    %393 = arith.mulf %388, %392 : vector<4x32xf32>
    %c16_89 = arith.constant 16 : index
    %c0_90 = arith.constant 0 : index
    %394 = vector.load %arg10[%c16_89, %c0_90] : memref<32x32xf32, #tpu.memory_space<vmem>>, vector<4x32xf32>
    tpu.vector_store %arg10[%c16_89, %c0_90], %393 {strides = array<i32>} : memref<32x32xf32, #tpu.memory_space<vmem>>, vector<4x32xf32>,
    %395 = vector.extract_strided_slice %246 {offsets = [20, 0], sizes = [4, 128], strides = [1, 1]} : vector<32x128xf32> to vector<4x128xf32>
    %cst_91 = arith.constant dense<0.000000e+00> : vector<4x128xf32>
    %396 = tpu.matmul %393, %247, %cst_91 {dimension_numbers = #tpu.dot_dimension_numbers<[1], [0], [0], [1], [0, 0, 1, 1], [], []>} : vector<4x32xf32>, vector<32x128xf32>, vector<4x128xf32> -> vector<4x128xf32>
    %397 = arith.addf %395, %396 : vector<4x128xf32>
    %398 = vector.extract_strided_slice %397 {offsets = [0, 0], sizes = [4, 32], strides = [1, 1]} : vector<4x128xf32> to vector<4x32xf32>
    %399 = arith.negf %398 : vector<4x32xf32>
    %400 = math.exp %399 : vector<4x32xf32>
    %cst_92 = arith.constant 1.000000e+00 : f32
    %401 = vector.broadcast %cst_92 : f32 to vector<4x32xf32>
    %402 = arith.addf %401, %400 : vector<4x32xf32>
    %403 = arith.divf %401, %402 : vector<4x32xf32>
    %404 = vector.extract_strided_slice %397 {offsets = [0, 32], sizes = [4, 32], strides = [1, 1]} : vector<4x128xf32> to vector<4x32xf32>
    %405 = arith.negf %404 : vector<4x32xf32>
    %406 = math.exp %405 : vector<4x32xf32>
    %cst_93 = arith.constant 1.000000e+00 : f32
    %407 = vector.broadcast %cst_93 : f32 to vector<4x32xf32>
    %408 = arith.addf %407, %406 : vector<4x32xf32>
    %409 = arith.divf %407, %408 : vector<4x32xf32>
    %410 = vector.extract_strided_slice %397 {offsets = [0, 64], sizes = [4, 32], strides = [1, 1]} : vector<4x128xf32> to vector<4x32xf32>
    %411 = math.tanh %410 : vector<4x32xf32>
    %412 = vector.extract_strided_slice %397 {offsets = [0, 96], sizes = [4, 32], strides = [1, 1]} : vector<4x128xf32> to vector<4x32xf32>
    %413 = arith.negf %412 : vector<4x32xf32>
    %414 = math.exp %413 : vector<4x32xf32>
    %cst_94 = arith.constant 1.000000e+00 : f32
    %415 = vector.broadcast %cst_94 : f32 to vector<4x32xf32>
    %416 = arith.addf %415, %414 : vector<4x32xf32>
    %417 = arith.divf %415, %416 : vector<4x32xf32>
    %418 = arith.mulf %409, %391 : vector<4x32xf32>
    %419 = arith.mulf %403, %411 : vector<4x32xf32>
    %420 = arith.addf %418, %419 : vector<4x32xf32>
    %421 = math.tanh %420 : vector<4x32xf32>
    %422 = arith.mulf %417, %421 : vector<4x32xf32>
    %c20_95 = arith.constant 20 : index
    %c0_96 = arith.constant 0 : index
    %423 = vector.load %arg10[%c20_95, %c0_96] : memref<32x32xf32, #tpu.memory_space<vmem>>, vector<4x32xf32>
    tpu.vector_store %arg10[%c20_95, %c0_96], %422 {strides = array<i32>} : memref<32x32xf32, #tpu.memory_space<vmem>>, vector<4x32xf32>,
    %424 = vector.extract_strided_slice %246 {offsets = [24, 0], sizes = [4, 128], strides = [1, 1]} : vector<32x128xf32> to vector<4x128xf32>
    %cst_97 = arith.constant dense<0.000000e+00> : vector<4x128xf32>
    %425 = tpu.matmul %422, %247, %cst_97 {dimension_numbers = #tpu.dot_dimension_numbers<[1], [0], [0], [1], [0, 0, 1, 1], [], []>} : vector<4x32xf32>, vector<32x128xf32>, vector<4x128xf32> -> vector<4x128xf32>
    %426 = arith.addf %424, %425 : vector<4x128xf32>
    %427 = vector.extract_strided_slice %426 {offsets = [0, 0], sizes = [4, 32], strides = [1, 1]} : vector<4x128xf32> to vector<4x32xf32>
    %428 = arith.negf %427 : vector<4x32xf32>
    %429 = math.exp %428 : vector<4x32xf32>
    %cst_98 = arith.constant 1.000000e+00 : f32
    %430 = vector.broadcast %cst_98 : f32 to vector<4x32xf32>
    %431 = arith.addf %430, %429 : vector<4x32xf32>
    %432 = arith.divf %430, %431 : vector<4x32xf32>
    %433 = vector.extract_strided_slice %426 {offsets = [0, 32], sizes = [4, 32], strides = [1, 1]} : vector<4x128xf32> to vector<4x32xf32>
    %434 = arith.negf %433 : vector<4x32xf32>
    %435 = math.exp %434 : vector<4x32xf32>
    %cst_99 = arith.constant 1.000000e+00 : f32
    %436 = vector.broadcast %cst_99 : f32 to vector<4x32xf32>
    %437 = arith.addf %436, %435 : vector<4x32xf32>
    %438 = arith.divf %436, %437 : vector<4x32xf32>
    %439 = vector.extract_strided_slice %426 {offsets = [0, 64], sizes = [4, 32], strides = [1, 1]} : vector<4x128xf32> to vector<4x32xf32>
    %440 = math.tanh %439 : vector<4x32xf32>
    %441 = vector.extract_strided_slice %426 {offsets = [0, 96], sizes = [4, 32], strides = [1, 1]} : vector<4x128xf32> to vector<4x32xf32>
    %442 = arith.negf %441 : vector<4x32xf32>
    %443 = math.exp %442 : vector<4x32xf32>
    %cst_100 = arith.constant 1.000000e+00 : f32
    %444 = vector.broadcast %cst_100 : f32 to vector<4x32xf32>
    %445 = arith.addf %444, %443 : vector<4x32xf32>
    %446 = arith.divf %444, %445 : vector<4x32xf32>
    %447 = arith.mulf %438, %420 : vector<4x32xf32>
    %448 = arith.mulf %432, %440 : vector<4x32xf32>
    %449 = arith.addf %447, %448 : vector<4x32xf32>
    %450 = math.tanh %449 : vector<4x32xf32>
    %451 = arith.mulf %446, %450 : vector<4x32xf32>
    %c24_101 = arith.constant 24 : index
    %c0_102 = arith.constant 0 : index
    %452 = vector.load %arg10[%c24_101, %c0_102] : memref<32x32xf32, #tpu.memory_space<vmem>>, vector<4x32xf32>
    tpu.vector_store %arg10[%c24_101, %c0_102], %451 {strides = array<i32>} : memref<32x32xf32, #tpu.memory_space<vmem>>, vector<4x32xf32>,
    %453 = vector.extract_strided_slice %246 {offsets = [28, 0], sizes = [4, 128], strides = [1, 1]} : vector<32x128xf32> to vector<4x128xf32>
    %cst_103 = arith.constant dense<0.000000e+00> : vector<4x128xf32>
    %454 = tpu.matmul %451, %247, %cst_103 {dimension_numbers = #tpu.dot_dimension_numbers<[1], [0], [0], [1], [0, 0, 1, 1], [], []>} : vector<4x32xf32>, vector<32x128xf32>, vector<4x128xf32> -> vector<4x128xf32>
    %455 = arith.addf %453, %454 : vector<4x128xf32>
    %456 = vector.extract_strided_slice %455 {offsets = [0, 0], sizes = [4, 32], strides = [1, 1]} : vector<4x128xf32> to vector<4x32xf32>
    %457 = arith.negf %456 : vector<4x32xf32>
    %458 = math.exp %457 : vector<4x32xf32>
    %cst_104 = arith.constant 1.000000e+00 : f32
    %459 = vector.broadcast %cst_104 : f32 to vector<4x32xf32>
    %460 = arith.addf %459, %458 : vector<4x32xf32>
    %461 = arith.divf %459, %460 : vector<4x32xf32>
    %462 = vector.extract_strided_slice %455 {offsets = [0, 32], sizes = [4, 32], strides = [1, 1]} : vector<4x128xf32> to vector<4x32xf32>
    %463 = arith.negf %462 : vector<4x32xf32>
    %464 = math.exp %463 : vector<4x32xf32>
    %cst_105 = arith.constant 1.000000e+00 : f32
    %465 = vector.broadcast %cst_105 : f32 to vector<4x32xf32>
    %466 = arith.addf %465, %464 : vector<4x32xf32>
    %467 = arith.divf %465, %466 : vector<4x32xf32>
    %468 = vector.extract_strided_slice %455 {offsets = [0, 64], sizes = [4, 32], strides = [1, 1]} : vector<4x128xf32> to vector<4x32xf32>
    %469 = math.tanh %468 : vector<4x32xf32>
    %470 = vector.extract_strided_slice %455 {offsets = [0, 96], sizes = [4, 32], strides = [1, 1]} : vector<4x128xf32> to vector<4x32xf32>
    %471 = arith.negf %470 : vector<4x32xf32>
    %472 = math.exp %471 : vector<4x32xf32>
    %cst_106 = arith.constant 1.000000e+00 : f32
    %473 = vector.broadcast %cst_106 : f32 to vector<4x32xf32>
    %474 = arith.addf %473, %472 : vector<4x32xf32>
    %475 = arith.divf %473, %474 : vector<4x32xf32>
    %476 = arith.mulf %467, %449 : vector<4x32xf32>
    %477 = arith.mulf %461, %469 : vector<4x32xf32>
    %478 = arith.addf %476, %477 : vector<4x32xf32>
    %479 = math.tanh %478 : vector<4x32xf32>
    %480 = arith.mulf %475, %479 : vector<4x32xf32>
    %c28_107 = arith.constant 28 : index
    %c0_108 = arith.constant 0 : index
    %481 = vector.load %arg10[%c28_107, %c0_108] : memref<32x32xf32, #tpu.memory_space<vmem>>, vector<4x32xf32>
    tpu.vector_store %arg10[%c28_107, %c0_108], %480 {strides = array<i32>} : memref<32x32xf32, #tpu.memory_space<vmem>>, vector<4x32xf32>,
    %c0_109 = arith.constant 0 : index
    %c0_110 = arith.constant 0 : index
    %482 = vector.load %arg10[%c0_109, %c0_110] : memref<32x32xf32, #tpu.memory_space<vmem>>, vector<32x32xf32>
    %c0_111 = arith.constant 0 : index
    %c0_112 = arith.constant 0 : index
    %483 = vector.load %arg7[%c0_111, %c0_112] : memref<32x8xf32, #tpu.memory_space<vmem>>, vector<32x8xf32>
    %cst_113 = arith.constant dense<0.000000e+00> : vector<32x8xf32>
    %484 = tpu.matmul %482, %483, %cst_113 {dimension_numbers = #tpu.dot_dimension_numbers<[1], [0], [0], [1], [0, 0, 1, 1], [], []>} : vector<32x32xf32>, vector<32x8xf32>, vector<32x8xf32> -> vector<32x8xf32>
    %c0_114 = arith.constant 0 : index
    %c0_115 = arith.constant 0 : index
    %485 = vector.load %arg8[%c0_114, %c0_115] : memref<1x8xf32, #tpu.memory_space<vmem>>, vector<1x8xf32>
    %486 = vector.broadcast %485 : vector<1x8xf32> to vector<32x8xf32>
    %487 = arith.addf %484, %486 : vector<32x8xf32>
    %c0_116 = arith.constant 0 : index
    %c0_117 = arith.constant 0 : index
    %488 = vector.load %arg9[%c0_116, %c0_117] : memref<32x8xf32, #tpu.memory_space<vmem>>, vector<32x8xf32>
    tpu.vector_store %arg9[%c0_116, %c0_117], %487 {strides = array<i32>} : memref<32x8xf32, #tpu.memory_space<vmem>>, vector<32x8xf32>,
    return
  }
}

</mosaic_0001>

<llo_original>
// kernel: tpu_custom_call.1
$region0: #{tpu_custom_call.1}
  #allocation0 [shape = 'u32[]', space=smem, size = 0x4, offset = 0x4, fixed_abs, tag = 'smem constant byte address 0x4 - core index']
  #allocation1 [shape = 'u32[144,128]{1,0:T(1,128)}', space=vmem, size = 0x12000, scoped, tag = 'internal scratch']
  #allocation2 [shape = 'f32[32,32]{1,0:T(8,128)}', space=vmem, size = 0x4000, scoped, tag = 'scratch operand']
  %s0 = inlined_call_operand.vmem [shape: f32[32,16], index: 0, kind: input, shape index: {}]
  %s1 = inlined_call_operand.hbm [shape: f32[16,128], index: 1, kind: input, shape index: {}]
  %s2 = inlined_call_operand.vmem [shape: f32[32,128], index: 2, kind: input, shape index: {}]
  %s3 = inlined_call_operand.vmem [shape: f32[1,128], index: 3, kind: input, shape index: {}]
  %s4 = inlined_call_operand.vmem [shape: f32[32,128], index: 4, kind: input, shape index: {}]
  %s5 = inlined_call_operand.vmem [shape: f32[32,128], index: 5, kind: input, shape index: {}]
  %s6 = inlined_call_operand.vmem [shape: f32[1,128], index: 6, kind: input, shape index: {}]
  %s7 = inlined_call_operand.vmem [shape: f32[32,8], index: 7, kind: input, shape index: {}]
  %s8 = inlined_call_operand.vmem [shape: f32[1,8], index: 8, kind: input, shape index: {}]
  %s9 = inlined_call_operand.vmem [shape: f32[32,8], index: 9, kind: output, shape index: {}]
  %s10 = sld [smem:[#allocation0]]
  $region50: #{tpu_custom_call.1} parent=0
    _
  %s12 = ssub.s32 1, %s10
  %s13 = scalar_select 0, %s12, %s10
  $region1: #{tpu_custom_call.1} parent=0
    #allocation3 [shape = 'u8[8192]{0}', space=vmem, size = 0x2000, scoped, tag = 'input window, operand 1, single buffered']
    #allocation4 [shape = 's32[1]{0}', space=sflag, size = 0x4, scoped, tag = 'scoped memory for tpu_custom_call.1']
    %14 = vsyncpa [#allocation4], 0
    // Predicated region
    $region2: #{tpu_custom_call.1} parent=1 // pred_check
      _
    $region3: #{tpu_custom_call.1} parent=1 // pred_check_branch
      %16 = sbr.rel (0) target = $region5
    $region4: #{tpu_custom_call.1} parent=1 // pred_region
      _
    $region5: #{tpu_custom_call.1} parent=1 // pred_fallthru
      _
    // Predicated region
    $region6: #{tpu_custom_call.1} parent=1 // pred_check
      _
    $region7: #{tpu_custom_call.1} parent=1 // pred_check_branch
      %18 = sbr.rel (0) target = $region9
    $region8: #{tpu_custom_call.1} parent=1 // pred_region
      %s20 = ssub.s32 256, 256
      %21 = vsyncadd [#allocation4], %s20
      %s22 = sshll.u32 [#allocation3], 4
      %s23 = int_to_ptr.vmem [resolvable:$true] %s22
      %28 = dma.hbm_to_vmem [thread:$0]  %s1, 256, %s23, [#allocation4], 128, 128, 8
    $region9: #{tpu_custom_call.1} parent=1 // pred_fallthru
      _
    // Predicated region
    $region10: #{tpu_custom_call.1} parent=1 // pred_check
      _
    $region11: #{tpu_custom_call.1} parent=1 // pred_check_branch
      %30 = sbr.rel (0) target = $region13
    $region12: #{tpu_custom_call.1} parent=1 // pred_region
      _
    $region13: #{tpu_custom_call.1} parent=1 // pred_fallthru
      _
    // Predicated region
    $region14: #{tpu_custom_call.1} parent=1 // pred_check
      _
    $region15: #{tpu_custom_call.1} parent=1 // pred_check_branch
      %32 = sbr.rel (0) target = $region17
    $region16: #{tpu_custom_call.1} parent=1 // pred_region
      _
    $region17: #{tpu_custom_call.1} parent=1 // pred_fallthru
      _
    // Predicated region
    $region18: #{tpu_custom_call.1} parent=1 // pred_check
      _
    $region19: #{tpu_custom_call.1} parent=1 // pred_check_branch
      %34 = sbr.rel (0) target = $region21
    $region20: #{tpu_custom_call.1} parent=1 // pred_region
      _
    $region21: #{tpu_custom_call.1} parent=1 // pred_fallthru
      _
    // Predicated region
    $region22: #{tpu_custom_call.1} parent=1 // pred_check
      _
    $region23: #{tpu_custom_call.1} parent=1 // pred_check_branch
      %36 = sbr.rel (0) target = $region25
    $region24: #{tpu_custom_call.1} parent=1 // pred_region
      _
    $region25: #{tpu_custom_call.1} parent=1 // pred_fallthru
      _
    // Predicated region
    $region26: #{tpu_custom_call.1} parent=1 // pred_check
      _
    $region27: #{tpu_custom_call.1} parent=1 // pred_check_branch
      %38 = sbr.rel (0) target = $region29
    $region28: #{tpu_custom_call.1} parent=1 // pred_region
      _
    $region29: #{tpu_custom_call.1} parent=1 // pred_fallthru
      _
    // Predicated region
    $region30: #{tpu_custom_call.1} parent=1 // pred_check
      _
    $region31: #{tpu_custom_call.1} parent=1 // pred_check_branch
      %40 = sbr.rel (0) target = $region33
    $region32: #{tpu_custom_call.1} parent=1 // pred_region
      _
    $region33: #{tpu_custom_call.1} parent=1 // pred_fallthru
      _
    // Predicated region
    $region34: #{tpu_custom_call.1} parent=1 // pred_check
      _
    $region35: #{tpu_custom_call.1} parent=1 // pred_check_branch
      %42 = sbr.rel (0) target = $region37
    $region36: #{tpu_custom_call.1} parent=1 // pred_region
      _
    $region37: #{tpu_custom_call.1} parent=1 // pred_fallthru
      _
    // Predicated region
    $region38: #{tpu_custom_call.1} parent=1 // pred_check
      _
    $region39: #{tpu_custom_call.1} parent=1 // pred_check_branch
      %44 = sbr.rel (0) target = $region41
    $region40: #{tpu_custom_call.1} parent=1 // pred_region
      %45 = dma.done [#allocation4], 256
    $region41: #{tpu_custom_call.1} parent=1 // pred_fallthru
      _
    %v46 = vld [vmem:[%s0] sm:$0xff]
    %v47 = vld [vmem:[%s0 + $0x8] sm:$0xff]
    %v48 = vld [vmem:[%s0 + $0x10] sm:$0xff]
    %v49 = vld [vmem:[%s0 + $0x18] sm:$0xff]
    %v50 = vld [vmem:[#allocation3] sm:$0xff]
    %v51 = vld [vmem:[#allocation3 + $0x8] sm:$0xff]
    %v52 = vld [vmem:[%s3] sm:$0x1]
    %v54 = vlaneseq
    %v55 = vshrl.u32 %v54, 7
    %v56 = vsub.s32 0, %v55
    %v57 = vrot.slane %v52, %v56
    %vm59 = vcmask 130048
    %v61 = vsel %vm59, %v46, 0
    %v64 = vsel %vm59, %v47, 0
    %v67 = vsel %vm59, %v48, 0
    %v70 = vsel %vm59, %v49, 0
    %72 = vmatprep.subr.mxu0 0.0
    %73 = vmatpush1.msra.mxu0 0.0
    %74 = vmatprep.subr.mxu0 0.0
    %75 = vmatpush1.msra.mxu0 0.0
    %76 = vmatprep.subr.mxu0 0.0
    %77 = vmatpush1.msra.mxu0 0.0
    %78 = vmatprep.subr.mxu0 0.0
    %79 = vmatpush1.msra.mxu0 0.0
    %80 = vmatprep.subr.mxu0 0.0
    %81 = vmatpush1.msra.mxu0 0.0
    %82 = vmatprep.subr.mxu0 0.0
    %83 = vmatpush1.msra.mxu0 0.0
    %84 = vmatprep.subr.mxu0 0.0
    %85 = vmatpush1.msra.mxu0 0.0
    %86 = vmatprep.subr.mxu0 0.0
    %87 = vmatpush1.msra.mxu0 0.0
    %88 = vmatprep.subr.mxu0 0.0
    %89 = vmatpush1.msra.mxu0 0.0
    %90 = vmatprep.subr.mxu0 0.0
    %91 = vmatpush1.msra.mxu0 0.0
    %92 = vmatprep.subr.mxu0 0.0
    %93 = vmatpush1.msra.mxu0 0.0
    %94 = vmatprep.subr.mxu0 0.0
    %95 = vmatpush1.msra.mxu0 0.0
    %96 = vmatprep.subr.mxu0 0.0
    %97 = vmatpush1.msra.mxu0 0.0
    %98 = vmatprep.subr.mxu0 0.0
    %99 = vmatpush1.msra.mxu0 0.0
    %100 = vmatprep.subr.mxu0 0.0
    %101 = vmatpush1.msra.mxu0 %v51
    %102 = vmatprep.subr.mxu0 0.0
    %103 = vmatpush1.msra.mxu0 %v50
    %104 = vmatprep.subr.mxu0 0.0
    %105 = vmatpush2.msra.mxu0 0.0
    %106 = vmatprep.subr.mxu0 0.0
    %107 = vmatpush2.msra.mxu0 0.0
    %108 = vmatprep.subr.mxu0 0.0
    %109 = vmatpush2.msra.mxu0 0.0
    %110 = vmatprep.subr.mxu0 0.0
    %111 = vmatpush2.msra.mxu0 0.0
    %112 = vmatprep.subr.mxu0 0.0
    %113 = vmatpush2.msra.mxu0 0.0
    %114 = vmatprep.subr.mxu0 0.0
    %115 = vmatpush2.msra.mxu0 0.0
    %116 = vmatprep.subr.mxu0 0.0
    %117 = vmatpush2.msra.mxu0 0.0
    %118 = vmatprep.subr.mxu0 0.0
    %119 = vmatpush2.msra.mxu0 0.0
    %120 = vmatprep.subr.mxu0 0.0
    %121 = vmatpush2.msra.mxu0 0.0
    %122 = vmatprep.subr.mxu0 0.0
    %123 = vmatpush2.msra.mxu0 0.0
    %124 = vmatprep.subr.mxu0 0.0
    %125 = vmatpush2.msra.mxu0 0.0
    %126 = vmatprep.subr.mxu0 0.0
    %127 = vmatpush2.msra.mxu0 0.0
    %128 = vmatprep.subr.mxu0 0.0
    %129 = vmatpush2.msra.mxu0 0.0
    %130 = vmatprep.subr.mxu0 0.0
    %131 = vmatpush2.msra.mxu0 0.0
    %132 = vmatprep.subr.mxu0 0.0
    %133 = vmatpush2.msra.mxu0 0.0
    %134 = vmatprep.subr.mxu0 0.0
    %135 = vmatpush2.msra.mxu0 0.0
    %136 = vmatprep.mubr.f32.mxu0 0.0
    %137 = vmatmul.mubr.f32.gmra.mxu0 %v61
    %v138 = vpop.f32.mrf.mxu0
    %v139 = vadd.f32 %v57, %v138
    %v140 = vpop.f32.mrf.mxu0
    %141 = vmatprep.mubr.f32.mxu0 0.0
    %142 = vmatmul.mubr.f32.gmra.mxu0 %v64
    %v143 = vpop.f32.mrf.mxu0
    %v144 = vadd.f32 %v57, %v143
    %v145 = vpop.f32.mrf.mxu0
    %146 = vmatprep.mubr.f32.mxu0 0.0
    %147 = vmatmul.mubr.f32.gmra.mxu0 %v67
    %v148 = vpop.f32.mrf.mxu0
    %v149 = vadd.f32 %v57, %v148
    %v150 = vpop.f32.mrf.mxu0
    %151 = vmatprep.mubr.f32.mxu0 0.0
    %152 = vmatmul.mubr.f32.gmra.mxu0 %v70
    %v153 = vpop.f32.mrf.mxu0
    %v154 = vadd.f32 %v57, %v153
    %v155 = vpop.f32.mrf.mxu0
    %156 = vdwg.mxu0
    %v157 = vld [vmem:[%s2] sm:$0xff]
    %v158 = vld [vmem:[%s2 + $0x8] sm:$0xff]
    %v159 = vld [vmem:[%s2 + $0x10] sm:$0xff]
    %v160 = vld [vmem:[%s2 + $0x18] sm:$0xff]
    %vm161 = vcmask 261120
    %v163 = vsel %vm161, 0.0, 0
    %165 = vmatprep.subr.mxu0 0.0
    %166 = vmatpush1.msra.mxu0 0.0
    %167 = vmatprep.subr.mxu0 0.0
    %168 = vmatpush1.msra.mxu0 0.0
    %169 = vmatprep.subr.mxu0 0.0
    %170 = vmatpush1.msra.mxu0 0.0
    %171 = vmatprep.subr.mxu0 0.0
    %172 = vmatpush1.msra.mxu0 0.0
    %173 = vmatprep.subr.mxu0 0.0
    %174 = vmatpush1.msra.mxu0 0.0
    %175 = vmatprep.subr.mxu0 0.0
    %176 = vmatpush1.msra.mxu0 0.0
    %177 = vmatprep.subr.mxu0 0.0
    %178 = vmatpush1.msra.mxu0 0.0
    %179 = vmatprep.subr.mxu0 0.0
    %180 = vmatpush1.msra.mxu0 0.0
    %181 = vmatprep.subr.mxu0 0.0
    %182 = vmatpush1.msra.mxu0 0.0
    %183 = vmatprep.subr.mxu0 0.0
    %184 = vmatpush1.msra.mxu0 0.0
    %185 = vmatprep.subr.mxu0 0.0
    %186 = vmatpush1.msra.mxu0 0.0
    %187 = vmatprep.subr.mxu0 0.0
    %188 = vmatpush1.msra.mxu0 0.0
    %189 = vmatprep.subr.mxu0 0.0
    %190 = vmatpush1.msra.mxu0 %v160
    %191 = vmatprep.subr.mxu0 0.0
    %192 = vmatpush1.msra.mxu0 %v159
    %193 = vmatprep.subr.mxu0 0.0
    %194 = vmatpush1.msra.mxu0 %v158
    %195 = vmatprep.subr.mxu0 0.0
    %196 = vmatpush1.msra.mxu0 %v157
    %197 = vmatprep.subr.mxu0 0.0
    %198 = vmatpush2.msra.mxu0 0.0
    %199 = vmatprep.subr.mxu0 0.0
    %200 = vmatpush2.msra.mxu0 0.0
    %201 = vmatprep.subr.mxu0 0.0
    %202 = vmatpush2.msra.mxu0 0.0
    %203 = vmatprep.subr.mxu0 0.0
    %204 = vmatpush2.msra.mxu0 0.0
    %205 = vmatprep.subr.mxu0 0.0
    %206 = vmatpush2.msra.mxu0 0.0
    %207 = vmatprep.subr.mxu0 0.0
    %208 = vmatpush2.msra.mxu0 0.0
    %209 = vmatprep.subr.mxu0 0.0
    %210 = vmatpush2.msra.mxu0 0.0
    %211 = vmatprep.subr.mxu0 0.0
    %212 = vmatpush2.msra.mxu0 0.0
    %213 = vmatprep.subr.mxu0 0.0
    %214 = vmatpush2.msra.mxu0 0.0
    %215 = vmatprep.subr.mxu0 0.0
    %216 = vmatpush2.msra.mxu0 0.0
    %217 = vmatprep.subr.mxu0 0.0
    %218 = vmatpush2.msra.mxu0 0.0
    %219 = vmatprep.subr.mxu0 0.0
    %220 = vmatpush2.msra.mxu0 0.0
    %221 = vmatprep.subr.mxu0 0.0
    %222 = vmatpush2.msra.mxu0 0.0
    %223 = vmatprep.subr.mxu0 0.0
    %224 = vmatpush2.msra.mxu0 0.0
    %225 = vmatprep.subr.mxu0 0.0
    %226 = vmatpush2.msra.mxu0 0.0
    %227 = vmatprep.subr.mxu0 0.0
    %228 = vmatpush2.msra.mxu0 0.0
    %229 = vmatprep.mubr.f32.mxu0 0.0
    %230 = vmatmul.mubr.f32.gmra.mxu0 %v163
    %v231 = vpop.f32.mrf.mxu0
    %v232 = vadd.f32 0.0, %v231
    %v233 = vpop.f32.mrf.mxu0
    %234 = vdwg.mxu0
    %v235 = vadd.f32 %v139, %v232
    %v236 = vxor.u32 %v235, 2147483648
    %v237 = vmul.f32 %v236, 1.442695
    %v238 = vpow.pop %v237
    %v239 = vadd.f32 %v238, 1.0
    %v240 = vrcp.pop %v239
    %v241 = vmul.f32 1.0, %v240
    %v242 = vtanh.pop %v235
    %v243 = vmul.f32 %v241, 0.0
    %245 = vrot.lane.b32.xlu0 %v242, 64
    %v246 = vpop.permute.xlu0 %245
    %v248 = vmul.f32 %v241, %v246
    %250 = vrot.lane.b32.xlu0 %v248, 32
    %v251 = vpop.permute.xlu0 %250
    %v253 = vadd.f32 %v243, %v251
    %v254 = vtanh.pop %v253
    %256 = vrot.lane.b32.xlu0 %v254, 64
    %v257 = vpop.permute.xlu0 %256
    %v259 = vmul.f32 %v241, %v257
    %261 = vrot.lane.b32.xlu0 %v259, 32
    %v262 = vpop.permute.xlu0 %261
    %vm264 = vcmask 257024
    %265 = vst.msk [vmem:[#allocation2] sm:$0xf] %vm264, %v262
    %v266 = vsel %vm161, %v262, 0
    %268 = vmatprep.subr.mxu0 0.0
    %269 = vmatpush1.msra.mxu0 0.0
    %270 = vmatprep.subr.mxu0 0.0
    %271 = vmatpush1.msra.mxu0 0.0
    %272 = vmatprep.subr.mxu0 0.0
    %273 = vmatpush1.msra.mxu0 0.0
    %274 = vmatprep.subr.mxu0 0.0
    %275 = vmatpush1.msra.mxu0 0.0
    %276 = vmatprep.subr.mxu0 0.0
    %277 = vmatpush1.msra.mxu0 0.0
    %278 = vmatprep.subr.mxu0 0.0
    %279 = vmatpush1.msra.mxu0 0.0
    %280 = vmatprep.subr.mxu0 0.0
    %281 = vmatpush1.msra.mxu0 0.0
    %282 = vmatprep.subr.mxu0 0.0
    %283 = vmatpush1.msra.mxu0 0.0
    %284 = vmatprep.subr.mxu0 0.0
    %285 = vmatpush1.msra.mxu0 0.0
    %286 = vmatprep.subr.mxu0 0.0
    %287 = vmatpush1.msra.mxu0 0.0
    %288 = vmatprep.subr.mxu0 0.0
    %289 = vmatpush1.msra.mxu0 0.0
    %290 = vmatprep.subr.mxu0 0.0
    %291 = vmatpush1.msra.mxu0 0.0
    %292 = vmatprep.subr.mxu0 0.0
    %293 = vmatpush1.msra.mxu0 %v160
    %294 = vmatprep.subr.mxu0 0.0
    %295 = vmatpush1.msra.mxu0 %v159
    %296 = vmatprep.subr.mxu0 0.0
    %297 = vmatpush1.msra.mxu0 %v158
    %298 = vmatprep.subr.mxu0 0.0
    %299 = vmatpush1.msra.mxu0 %v157
    %300 = vmatprep.subr.mxu0 0.0
    %301 = vmatpush2.msra.mxu0 0.0
    %302 = vmatprep.subr.mxu0 0.0
    %303 = vmatpush2.msra.mxu0 0.0
    %304 = vmatprep.subr.mxu0 0.0
    %305 = vmatpush2.msra.mxu0 0.0
    %306 = vmatprep.subr.mxu0 0.0
    %307 = vmatpush2.msra.mxu0 0.0
    %308 = vmatprep.subr.mxu0 0.0
    %309 = vmatpush2.msra.mxu0 0.0
    %310 = vmatprep.subr.mxu0 0.0
    %311 = vmatpush2.msra.mxu0 0.0
    %312 = vmatprep.subr.mxu0 0.0
    %313 = vmatpush2.msra.mxu0 0.0
    %314 = vmatprep.subr.mxu0 0.0
    %315 = vmatpush2.msra.mxu0 0.0
    %316 = vmatprep.subr.mxu0 0.0
    %317 = vmatpush2.msra.mxu0 0.0
    %318 = vmatprep.subr.mxu0 0.0
    %319 = vmatpush2.msra.mxu0 0.0
    %320 = vmatprep.subr.mxu0 0.0
    %321 = vmatpush2.msra.mxu0 0.0
    %322 = vmatprep.subr.mxu0 0.0
    %323 = vmatpush2.msra.mxu0 0.0
    %324 = vmatprep.subr.mxu0 0.0
    %325 = vmatpush2.msra.mxu0 0.0
    %326 = vmatprep.subr.mxu0 0.0
    %327 = vmatpush2.msra.mxu0 0.0
    %328 = vmatprep.subr.mxu0 0.0
    %329 = vmatpush2.msra.mxu0 0.0
    %330 = vmatprep.subr.mxu0 0.0
    %331 = vmatpush2.msra.mxu0 0.0
    %332 = vmatprep.mubr.f32.mxu0 0.0
    %333 = vmatmul.mubr.f32.gmra.mxu0 %v266
    %v334 = vpop.f32.mrf.mxu0
    %v335 = vadd.f32 0.0, %v334
    %v336 = vpop.f32.mrf.mxu0
    %337 = vdwg.mxu0
    %v339 = vrot.slane %v335, 4
    %v341 = vadd.f32 %v139, %v339
    %v342 = vxor.u32 %v341, 2147483648
    %v343 = vmul.f32 %v342, 1.442695
    %v344 = vpow.pop %v343
    %v345 = vadd.f32 %v344, 1.0
    %v346 = vrcp.pop %v345
    %v347 = vmul.f32 1.0, %v346
    %v348 = vtanh.pop %v341
    %v350 = vrot.slane %v253, 4
    %v352 = vmul.f32 %v347, %v350
    %354 = vrot.lane.b32.xlu0 %v348, 64
    %v355 = vpop.permute.xlu0 %354
    %v357 = vmul.f32 %v347, %v355
    %359 = vrot.lane.b32.xlu0 %v357, 32
    %v360 = vpop.permute.xlu0 %359
    %v362 = vadd.f32 %v352, %v360
    %v363 = vtanh.pop %v362
    %365 = vrot.lane.b32.xlu0 %v363, 64
    %v366 = vpop.permute.xlu0 %365
    %v368 = vmul.f32 %v347, %v366
    %370 = vrot.lane.b32.xlu0 %v368, 32
    %v371 = vpop.permute.xlu0 %370
    %vm373 = vcmask 261124
    %374 = vst.msk [vmem:[#allocation2] sm:$0xf0] %vm373, %v371
    %v375 = vrot.slane %v368, 4
    %376 = vrot.lane.b32.xlu0 %v375, 32
    %v377 = vpop.permute.xlu0 %376
    %v378 = vsel %vm161, %v377, 0
    %380 = vmatprep.subr.mxu0 0.0
    %381 = vmatpush1.msra.mxu0 0.0
    %382 = vmatprep.subr.mxu0 0.0
    %383 = vmatpush1.msra.mxu0 0.0
    %384 = vmatprep.subr.mxu0 0.0
    %385 = vmatpush1.msra.mxu0 0.0
    %386 = vmatprep.subr.mxu0 0.0
    %387 = vmatpush1.msra.mxu0 0.0
    %388 = vmatprep.subr.mxu0 0.0
    %389 = vmatpush1.msra.mxu0 0.0
    %390 = vmatprep.subr.mxu0 0.0
    %391 = vmatpush1.msra.mxu0 0.0
    %392 = vmatprep.subr.mxu0 0.0
    %393 = vmatpush1.msra.mxu0 0.0
    %394 = vmatprep.subr.mxu0 0.0
    %395 = vmatpush1.msra.mxu0 0.0
    %396 = vmatprep.subr.mxu0 0.0
    %397 = vmatpush1.msra.mxu0 0.0
    %398 = vmatprep.subr.mxu0 0.0
    %399 = vmatpush1.msra.mxu0 0.0
    %400 = vmatprep.subr.mxu0 0.0
    %401 = vmatpush1.msra.mxu0 0.0
    %402 = vmatprep.subr.mxu0 0.0
    %403 = vmatpush1.msra.mxu0 0.0
    %404 = vmatprep.subr.mxu0 0.0
    %405 = vmatpush1.msra.mxu0 %v160
    %406 = vmatprep.subr.mxu0 0.0
    %407 = vmatpush1.msra.mxu0 %v159
    %408 = vmatprep.subr.mxu0 0.0
    %409 = vmatpush1.msra.mxu0 %v158
    %410 = vmatprep.subr.mxu0 0.0
    %411 = vmatpush1.msra.mxu0 %v157
    %412 = vmatprep.subr.mxu0 0.0
    %413 = vmatpush2.msra.mxu0 0.0
    %414 = vmatprep.subr.mxu0 0.0
    %415 = vmatpush2.msra.mxu0 0.0
    %416 = vmatprep.subr.mxu0 0.0
    %417 = vmatpush2.msra.mxu0 0.0
    %418 = vmatprep.subr.mxu0 0.0
    %419 = vmatpush2.msra.mxu0 0.0
    %420 = vmatprep.subr.mxu0 0.0
    %421 = vmatpush2.msra.mxu0 0.0
    %422 = vmatprep.subr.mxu0 0.0
    %423 = vmatpush2.msra.mxu0 0.0
    %424 = vmatprep.subr.mxu0 0.0
    %425 = vmatpush2.msra.mxu0 0.0
    %426 = vmatprep.subr.mxu0 0.0
    %427 = vmatpush2.msra.mxu0 0.0
    %428 = vmatprep.subr.mxu0 0.0
    %429 = vmatpush2.msra.mxu0 0.0
    %430 = vmatprep.subr.mxu0 0.0
    %431 = vmatpush2.msra.mxu0 0.0
    %432 = vmatprep.subr.mxu0 0.0
    %433 = vmatpush2.msra.mxu0 0.0
    %434 = vmatprep.subr.mxu0 0.0
    %435 = vmatpush2.msra.mxu0 0.0
    %436 = vmatprep.subr.mxu0 0.0
    %437 = vmatpush2.msra.mxu0 0.0
    %438 = vmatprep.subr.mxu0 0.0
    %439 = vmatpush2.msra.mxu0 0.0
    %440 = vmatprep.subr.mxu0 0.0
    %441 = vmatpush2.msra.mxu0 0.0
    %442 = vmatprep.subr.mxu0 0.0
    %443 = vmatpush2.msra.mxu0 0.0
    %444 = vmatprep.mubr.f32.mxu0 0.0
    %445 = vmatmul.mubr.f32.gmra.mxu0 %v378
    %v446 = vpop.f32.mrf.mxu0
    %v447 = vadd.f32 0.0, %v446
    %v448 = vpop.f32.mrf.mxu0
    %449 = vdwg.mxu0
    %v450 = vadd.f32 %v144, %v447
    %v451 = vxor.u32 %v450, 2147483648
    %v452 = vmul.f32 %v451, 1.442695
    %v453 = vpow.pop %v452
    %v454 = vadd.f32 %v453, 1.0
    %v455 = vrcp.pop %v454
    %v456 = vmul.f32 1.0, %v455
    %v457 = vtanh.pop %v450
    %v459 = vrot.slane %v362, 4
    %v461 = vmul.f32 %v456, %v459
    %463 = vrot.lane.b32.xlu0 %v457, 64
    %v464 = vpop.permute.xlu0 %463
    %v466 = vmul.f32 %v456, %v464
    %468 = vrot.lane.b32.xlu0 %v466, 32
    %v469 = vpop.permute.xlu0 %468
    %v471 = vadd.f32 %v461, %v469
    %v472 = vtanh.pop %v471
    %474 = vrot.lane.b32.xlu0 %v472, 64
    %v475 = vpop.permute.xlu0 %474
    %v477 = vmul.f32 %v456, %v475
    %479 = vrot.lane.b32.xlu0 %v477, 32
    %v480 = vpop.permute.xlu0 %479
    %482 = vst.msk [vmem:[#allocation2 + $0x8] sm:$0xf] %vm264, %v480
    %v483 = vsel %vm161, %v480, 0
    %485 = vmatprep.subr.mxu0 0.0
    %486 = vmatpush1.msra.mxu0 0.0
    %487 = vmatprep.subr.mxu0 0.0
    %488 = vmatpush1.msra.mxu0 0.0
    %489 = vmatprep.subr.mxu0 0.0
    %490 = vmatpush1.msra.mxu0 0.0
    %491 = vmatprep.subr.mxu0 0.0
    %492 = vmatpush1.msra.mxu0 0.0
    %493 = vmatprep.subr.mxu0 0.0
    %494 = vmatpush1.msra.mxu0 0.0
    %495 = vmatprep.subr.mxu0 0.0
    %496 = vmatpush1.msra.mxu0 0.0
    %497 = vmatprep.subr.mxu0 0.0
    %498 = vmatpush1.msra.mxu0 0.0
    %499 = vmatprep.subr.mxu0 0.0
    %500 = vmatpush1.msra.mxu0 0.0
    %501 = vmatprep.subr.mxu0 0.0
    %502 = vmatpush1.msra.mxu0 0.0
    %503 = vmatprep.subr.mxu0 0.0
    %504 = vmatpush1.msra.mxu0 0.0
    %505 = vmatprep.subr.mxu0 0.0
    %506 = vmatpush1.msra.mxu0 0.0
    %507 = vmatprep.subr.mxu0 0.0
    %508 = vmatpush1.msra.mxu0 0.0
    %509 = vmatprep.subr.mxu0 0.0
    %510 = vmatpush1.msra.mxu0 %v160
    %511 = vmatprep.subr.mxu0 0.0
    %512 = vmatpush1.msra.mxu0 %v159
    %513 = vmatprep.subr.mxu0 0.0
    %514 = vmatpush1.msra.mxu0 %v158
    %515 = vmatprep.subr.mxu0 0.0
    %516 = vmatpush1.msra.mxu0 %v157
    %517 = vmatprep.subr.mxu0 0.0
    %518 = vmatpush2.msra.mxu0 0.0
    %519 = vmatprep.subr.mxu0 0.0
    %520 = vmatpush2.msra.mxu0 0.0
    %521 = vmatprep.subr.mxu0 0.0
    %522 = vmatpush2.msra.mxu0 0.0
    %523 = vmatprep.subr.mxu0 0.0
    %524 = vmatpush2.msra.mxu0 0.0
    %525 = vmatprep.subr.mxu0 0.0
    %526 = vmatpush2.msra.mxu0 0.0
    %527 = vmatprep.subr.mxu0 0.0
    %528 = vmatpush2.msra.mxu0 0.0
    %529 = vmatprep.subr.mxu0 0.0
    %530 = vmatpush2.msra.mxu0 0.0
    %531 = vmatprep.subr.mxu0 0.0
    %532 = vmatpush2.msra.mxu0 0.0
    %533 = vmatprep.subr.mxu0 0.0
    %534 = vmatpush2.msra.mxu0 0.0
    %535 = vmatprep.subr.mxu0 0.0
    %536 = vmatpush2.msra.mxu0 0.0
    %537 = vmatprep.subr.mxu0 0.0
    %538 = vmatpush2.msra.mxu0 0.0
    %539 = vmatprep.subr.mxu0 0.0
    %540 = vmatpush2.msra.mxu0 0.0
    %541 = vmatprep.subr.mxu0 0.0
    %542 = vmatpush2.msra.mxu0 0.0
    %543 = vmatprep.subr.mxu0 0.0
    %544 = vmatpush2.msra.mxu0 0.0
    %545 = vmatprep.subr.mxu0 0.0
    %546 = vmatpush2.msra.mxu0 0.0
    %547 = vmatprep.subr.mxu0 0.0
    %548 = vmatpush2.msra.mxu0 0.0
    %549 = vmatprep.mubr.f32.mxu0 0.0
    %550 = vmatmul.mubr.f32.gmra.mxu0 %v483
    %v551 = vpop.f32.mrf.mxu0
    %v552 = vadd.f32 0.0, %v551
    %v553 = vpop.f32.mrf.mxu0
    %554 = vdwg.mxu0
    %v556 = vrot.slane %v552, 4
    %v558 = vadd.f32 %v144, %v556
    %v559 = vxor.u32 %v558, 2147483648
    %v560 = vmul.f32 %v559, 1.442695
    %v561 = vpow.pop %v560
    %v562 = vadd.f32 %v561, 1.0
    %v563 = vrcp.pop %v562
    %v564 = vmul.f32 1.0, %v563
    %v565 = vtanh.pop %v558
    %v567 = vrot.slane %v471, 4
    %v569 = vmul.f32 %v564, %v567
    %571 = vrot.lane.b32.xlu0 %v565, 64
    %v572 = vpop.permute.xlu0 %571
    %v574 = vmul.f32 %v564, %v572
    %576 = vrot.lane.b32.xlu0 %v574, 32
    %v577 = vpop.permute.xlu0 %576
    %v579 = vadd.f32 %v569, %v577
    %v580 = vtanh.pop %v579
    %582 = vrot.lane.b32.xlu0 %v580, 64
    %v583 = vpop.permute.xlu0 %582
    %v585 = vmul.f32 %v564, %v583
    %587 = vrot.lane.b32.xlu0 %v585, 32
    %v588 = vpop.permute.xlu0 %587
    %590 = vst.msk [vmem:[#allocation2 + $0x8] sm:$0xf0] %vm373, %v588
    %v591 = vrot.slane %v585, 4
    %592 = vrot.lane.b32.xlu0 %v591, 32
    %v593 = vpop.permute.xlu0 %592
    %v594 = vsel %vm161, %v593, 0
    %596 = vmatprep.subr.mxu0 0.0
    %597 = vmatpush1.msra.mxu0 0.0
    %598 = vmatprep.subr.mxu0 0.0
    %599 = vmatpush1.msra.mxu0 0.0
    %600 = vmatprep.subr.mxu0 0.0
    %601 = vmatpush1.msra.mxu0 0.0
    %602 = vmatprep.subr.mxu0 0.0
    %603 = vmatpush1.msra.mxu0 0.0
    %604 = vmatprep.subr.mxu0 0.0
    %605 = vmatpush1.msra.mxu0 0.0
    %606 = vmatprep.subr.mxu0 0.0
    %607 = vmatpush1.msra.mxu0 0.0
    %608 = vmatprep.subr.mxu0 0.0
    %609 = vmatpush1.msra.mxu0 0.0
    %610 = vmatprep.subr.mxu0 0.0
    %611 = vmatpush1.msra.mxu0 0.0
    %612 = vmatprep.subr.mxu0 0.0
    %613 = vmatpush1.msra.mxu0 0.0
    %614 = vmatprep.subr.mxu0 0.0
    %615 = vmatpush1.msra.mxu0 0.0
    %616 = vmatprep.subr.mxu0 0.0
    %617 = vmatpush1.msra.mxu0 0.0
    %618 = vmatprep.subr.mxu0 0.0
    %619 = vmatpush1.msra.mxu0 0.0
    %620 = vmatprep.subr.mxu0 0.0
    %621 = vmatpush1.msra.mxu0 %v160
    %622 = vmatprep.subr.mxu0 0.0
    %623 = vmatpush1.msra.mxu0 %v159
    %624 = vmatprep.subr.mxu0 0.0
    %625 = vmatpush1.msra.mxu0 %v158
    %626 = vmatprep.subr.mxu0 0.0
    %627 = vmatpush1.msra.mxu0 %v157
    %628 = vmatprep.subr.mxu0 0.0
    %629 = vmatpush2.msra.mxu0 0.0
    %630 = vmatprep.subr.mxu0 0.0
    %631 = vmatpush2.msra.mxu0 0.0
    %632 = vmatprep.subr.mxu0 0.0
    %633 = vmatpush2.msra.mxu0 0.0
    %634 = vmatprep.subr.mxu0 0.0
    %635 = vmatpush2.msra.mxu0 0.0
    %636 = vmatprep.subr.mxu0 0.0
    %637 = vmatpush2.msra.mxu0 0.0
    %638 = vmatprep.subr.mxu0 0.0
    %639 = vmatpush2.msra.mxu0 0.0
    %640 = vmatprep.subr.mxu0 0.0
    %641 = vmatpush2.msra.mxu0 0.0
    %642 = vmatprep.subr.mxu0 0.0
    %643 = vmatpush2.msra.mxu0 0.0
    %644 = vmatprep.subr.mxu0 0.0
    %645 = vmatpush2.msra.mxu0 0.0
    %646 = vmatprep.subr.mxu0 0.0
    %647 = vmatpush2.msra.mxu0 0.0
    %648 = vmatprep.subr.mxu0 0.0
    %649 = vmatpush2.msra.mxu0 0.0
    %650 = vmatprep.subr.mxu0 0.0
    %651 = vmatpush2.msra.mxu0 0.0
    %652 = vmatprep.subr.mxu0 0.0
    %653 = vmatpush2.msra.mxu0 0.0
    %654 = vmatprep.subr.mxu0 0.0
    %655 = vmatpush2.msra.mxu0 0.0
    %656 = vmatprep.subr.mxu0 0.0
    %657 = vmatpush2.msra.mxu0 0.0
    %658 = vmatprep.subr.mxu0 0.0
    %659 = vmatpush2.msra.mxu0 0.0
    %660 = vmatprep.mubr.f32.mxu0 0.0
    %661 = vmatmul.mubr.f32.gmra.mxu0 %v594
    %v662 = vpop.f32.mrf.mxu0
    %v663 = vadd.f32 0.0, %v662
    %v664 = vpop.f32.mrf.mxu0
    %665 = vdwg.mxu0
    %v666 = vadd.f32 %v149, %v663
    %v667 = vxor.u32 %v666, 2147483648
    %v668 = vmul.f32 %v667, 1.442695
    %v669 = vpow.pop %v668
    %v670 = vadd.f32 %v669, 1.0
    %v671 = vrcp.pop %v670
    %v672 = vmul.f32 1.0, %v671
    %v673 = vtanh.pop %v666
    %v675 = vrot.slane %v579, 4
    %v677 = vmul.f32 %v672, %v675
    %679 = vrot.lane.b32.xlu0 %v673, 64
    %v680 = vpop.permute.xlu0 %679
    %v682 = vmul.f32 %v672, %v680
    %684 = vrot.lane.b32.xlu0 %v682, 32
    %v685 = vpop.permute.xlu0 %684
    %v687 = vadd.f32 %v677, %v685
    %v688 = vtanh.pop %v687
    %690 = vrot.lane.b32.xlu0 %v688, 64
    %v691 = vpop.permute.xlu0 %690
    %v693 = vmul.f32 %v672, %v691
    %695 = vrot.lane.b32.xlu0 %v693, 32
    %v696 = vpop.permute.xlu0 %695
    %698 = vst.msk [vmem:[#allocation2 + $0x10] sm:$0xf] %vm264, %v696
    %v699 = vsel %vm161, %v696, 0
    %701 = vmatprep.subr.mxu0 0.0
    %702 = vmatpush1.msra.mxu0 0.0
    %703 = vmatprep.subr.mxu0 0.0
    %704 = vmatpush1.msra.mxu0 0.0
    %705 = vmatprep.subr.mxu0 0.0
    %706 = vmatpush1.msra.mxu0 0.0
    %707 = vmatprep.subr.mxu0 0.0
    %708 = vmatpush1.msra.mxu0 0.0
    %709 = vmatprep.subr.mxu0 0.0
    %710 = vmatpush1.msra.mxu0 0.0
    %711 = vmatprep.subr.mxu0 0.0
    %712 = vmatpush1.msra.mxu0 0.0
    %713 = vmatprep.subr.mxu0 0.0
    %714 = vmatpush1.msra.mxu0 0.0
    %715 = vmatprep.subr.mxu0 0.0
    %716 = vmatpush1.msra.mxu0 0.0
    %717 = vmatprep.subr.mxu0 0.0
    %718 = vmatpush1.msra.mxu0 0.0
    %719 = vmatprep.subr.mxu0 0.0
    %720 = vmatpush1.msra.mxu0 0.0
    %721 = vmatprep.subr.mxu0 0.0
    %722 = vmatpush1.msra.mxu0 0.0
    %723 = vmatprep.subr.mxu0 0.0
    %724 = vmatpush1.msra.mxu0 0.0
    %725 = vmatprep.subr.mxu0 0.0
    %726 = vmatpush1.msra.mxu0 %v160
    %727 = vmatprep.subr.mxu0 0.0
    %728 = vmatpush1.msra.mxu0 %v159
    %729 = vmatprep.subr.mxu0 0.0
    %730 = vmatpush1.msra.mxu0 %v158
    %731 = vmatprep.subr.mxu0 0.0
    %732 = vmatpush1.msra.mxu0 %v157
    %733 = vmatprep.subr.mxu0 0.0
    %734 = vmatpush2.msra.mxu0 0.0
    %735 = vmatprep.subr.mxu0 0.0
    %736 = vmatpush2.msra.mxu0 0.0
    %737 = vmatprep.subr.mxu0 0.0
    %738 = vmatpush2.msra.mxu0 0.0
    %739 = vmatprep.subr.mxu0 0.0
    %740 = vmatpush2.msra.mxu0 0.0
    %741 = vmatprep.subr.mxu0 0.0
    %742 = vmatpush2.msra.mxu0 0.0
    %743 = vmatprep.subr.mxu0 0.0
    %744 = vmatpush2.msra.mxu0 0.0
    %745 = vmatprep.subr.mxu0 0.0
    %746 = vmatpush2.msra.mxu0 0.0
    %747 = vmatprep.subr.mxu0 0.0
    %748 = vmatpush2.msra.mxu0 0.0
    %749 = vmatprep.subr.mxu0 0.0
    %750 = vmatpush2.msra.mxu0 0.0
    %751 = vmatprep.subr.mxu0 0.0
    %752 = vmatpush2.msra.mxu0 0.0
    %753 = vmatprep.subr.mxu0 0.0
    %754 = vmatpush2.msra.mxu0 0.0
    %755 = vmatprep.subr.mxu0 0.0
    %756 = vmatpush2.msra.mxu0 0.0
    %757 = vmatprep.subr.mxu0 0.0
    %758 = vmatpush2.msra.mxu0 0.0
    %759 = vmatprep.subr.mxu0 0.0
    %760 = vmatpush2.msra.mxu0 0.0
    %761 = vmatprep.subr.mxu0 0.0
    %762 = vmatpush2.msra.mxu0 0.0
    %763 = vmatprep.subr.mxu0 0.0
    %764 = vmatpush2.msra.mxu0 0.0
    %765 = vmatprep.mubr.f32.mxu0 0.0
    %766 = vmatmul.mubr.f32.gmra.mxu0 %v699
    %v767 = vpop.f32.mrf.mxu0
    %v768 = vadd.f32 0.0, %v767
    %v769 = vpop.f32.mrf.mxu0
    %770 = vdwg.mxu0
    %v772 = vrot.slane %v768, 4
    %v774 = vadd.f32 %v149, %v772
    %v775 = vxor.u32 %v774, 2147483648
    %v776 = vmul.f32 %v775, 1.442695
    %v777 = vpow.pop %v776
    %v778 = vadd.f32 %v777, 1.0
    %v779 = vrcp.pop %v778
    %v780 = vmul.f32 1.0, %v779
    %v781 = vtanh.pop %v774
    %v783 = vrot.slane %v687, 4
    %v785 = vmul.f32 %v780, %v783
    %787 = vrot.lane.b32.xlu0 %v781, 64
    %v788 = vpop.permute.xlu0 %787
    %v790 = vmul.f32 %v780, %v788
    %792 = vrot.lane.b32.xlu0 %v790, 32
    %v793 = vpop.permute.xlu0 %792
    %v795 = vadd.f32 %v785, %v793
    %v796 = vtanh.pop %v795
    %798 = vrot.lane.b32.xlu0 %v796, 64
    %v799 = vpop.permute.xlu0 %798
    %v801 = vmul.f32 %v780, %v799
    %803 = vrot.lane.b32.xlu0 %v801, 32
    %v804 = vpop.permute.xlu0 %803
    %806 = vst.msk [vmem:[#allocation2 + $0x10] sm:$0xf0] %vm373, %v804
    %v807 = vrot.slane %v801, 4
    %808 = vrot.lane.b32.xlu0 %v807, 32
    %v809 = vpop.permute.xlu0 %808
    %v810 = vsel %vm161, %v809, 0
    %812 = vmatprep.subr.mxu0 0.0
    %813 = vmatpush1.msra.mxu0 0.0
    %814 = vmatprep.subr.mxu0 0.0
    %815 = vmatpush1.msra.mxu0 0.0
    %816 = vmatprep.subr.mxu0 0.0
    %817 = vmatpush1.msra.mxu0 0.0
    %818 = vmatprep.subr.mxu0 0.0
    %819 = vmatpush1.msra.mxu0 0.0
    %820 = vmatprep.subr.mxu0 0.0
    %821 = vmatpush1.msra.mxu0 0.0
    %822 = vmatprep.subr.mxu0 0.0
    %823 = vmatpush1.msra.mxu0 0.0
    %824 = vmatprep.subr.mxu0 0.0
    %825 = vmatpush1.msra.mxu0 0.0
    %826 = vmatprep.subr.mxu0 0.0
    %827 = vmatpush1.msra.mxu0 0.0
    %828 = vmatprep.subr.mxu0 0.0
    %829 = vmatpush1.msra.mxu0 0.0
    %830 = vmatprep.subr.mxu0 0.0
    %831 = vmatpush1.msra.mxu0 0.0
    %832 = vmatprep.subr.mxu0 0.0
    %833 = vmatpush1.msra.mxu0 0.0
    %834 = vmatprep.subr.mxu0 0.0
    %835 = vmatpush1.msra.mxu0 0.0
    %836 = vmatprep.subr.mxu0 0.0
    %837 = vmatpush1.msra.mxu0 %v160
    %838 = vmatprep.subr.mxu0 0.0
    %839 = vmatpush1.msra.mxu0 %v159
    %840 = vmatprep.subr.mxu0 0.0
    %841 = vmatpush1.msra.mxu0 %v158
    %842 = vmatprep.subr.mxu0 0.0
    %843 = vmatpush1.msra.mxu0 %v157
    %844 = vmatprep.subr.mxu0 0.0
    %845 = vmatpush2.msra.mxu0 0.0
    %846 = vmatprep.subr.mxu0 0.0
    %847 = vmatpush2.msra.mxu0 0.0
    %848 = vmatprep.subr.mxu0 0.0
    %849 = vmatpush2.msra.mxu0 0.0
    %850 = vmatprep.subr.mxu0 0.0
    %851 = vmatpush2.msra.mxu0 0.0
    %852 = vmatprep.subr.mxu0 0.0
    %853 = vmatpush2.msra.mxu0 0.0
    %854 = vmatprep.subr.mxu0 0.0
    %855 = vmatpush2.msra.mxu0 0.0
    %856 = vmatprep.subr.mxu0 0.0
    %857 = vmatpush2.msra.mxu0 0.0
    %858 = vmatprep.subr.mxu0 0.0
    %859 = vmatpush2.msra.mxu0 0.0
    %860 = vmatprep.subr.mxu0 0.0
    %861 = vmatpush2.msra.mxu0 0.0
    %862 = vmatprep.subr.mxu0 0.0
    %863 = vmatpush2.msra.mxu0 0.0
    %864 = vmatprep.subr.mxu0 0.0
    %865 = vmatpush2.msra.mxu0 0.0
    %866 = vmatprep.subr.mxu0 0.0
    %867 = vmatpush2.msra.mxu0 0.0
    %868 = vmatprep.subr.mxu0 0.0
    %869 = vmatpush2.msra.mxu0 0.0
    %870 = vmatprep.subr.mxu0 0.0
    %871 = vmatpush2.msra.mxu0 0.0
    %872 = vmatprep.subr.mxu0 0.0
    %873 = vmatpush2.msra.mxu0 0.0
    %874 = vmatprep.subr.mxu0 0.0
    %875 = vmatpush2.msra.mxu0 0.0
    %876 = vmatprep.mubr.f32.mxu0 0.0
    %877 = vmatmul.mubr.f32.gmra.mxu0 %v810
    %v878 = vpop.f32.mrf.mxu0
    %v879 = vadd.f32 0.0, %v878
    %v880 = vpop.f32.mrf.mxu0
    %881 = vdwg.mxu0
    %v882 = vadd.f32 %v154, %v879
    %v883 = vxor.u32 %v882, 2147483648
    %v884 = vmul.f32 %v883, 1.442695
    %v885 = vpow.pop %v884
    %v886 = vadd.f32 %v885, 1.0
    %v887 = vrcp.pop %v886
    %v888 = vmul.f32 1.0, %v887
    %v889 = vtanh.pop %v882
    %v891 = vrot.slane %v795, 4
    %v893 = vmul.f32 %v888, %v891
    %895 = vrot.lane.b32.xlu0 %v889, 64
    %v896 = vpop.permute.xlu0 %895
    %v898 = vmul.f32 %v888, %v896
    %900 = vrot.lane.b32.xlu0 %v898, 32
    %v901 = vpop.permute.xlu0 %900
    %v903 = vadd.f32 %v893, %v901
    %v904 = vtanh.pop %v903
    %906 = vrot.lane.b32.xlu0 %v904, 64
    %v907 = vpop.permute.xlu0 %906
    %v909 = vmul.f32 %v888, %v907
    %911 = vrot.lane.b32.xlu0 %v909, 32
    %v912 = vpop.permute.xlu0 %911
    %914 = vst.msk [vmem:[#allocation2 + $0x18] sm:$0xf] %vm264, %v912
    %v915 = vsel %vm161, %v912, 0
    %917 = vmatprep.subr.mxu0 0.0
    %918 = vmatpush1.msra.mxu0 0.0
    %919 = vmatprep.subr.mxu0 0.0
    %920 = vmatpush1.msra.mxu0 0.0
    %921 = vmatprep.subr.mxu0 0.0
    %922 = vmatpush1.msra.mxu0 0.0
    %923 = vmatprep.subr.mxu0 0.0
    %924 = vmatpush1.msra.mxu0 0.0
    %925 = vmatprep.subr.mxu0 0.0
    %926 = vmatpush1.msra.mxu0 0.0
    %927 = vmatprep.subr.mxu0 0.0
    %928 = vmatpush1.msra.mxu0 0.0
    %929 = vmatprep.subr.mxu0 0.0
    %930 = vmatpush1.msra.mxu0 0.0
    %931 = vmatprep.subr.mxu0 0.0
    %932 = vmatpush1.msra.mxu0 0.0
    %933 = vmatprep.subr.mxu0 0.0
    %934 = vmatpush1.msra.mxu0 0.0
    %935 = vmatprep.subr.mxu0 0.0
    %936 = vmatpush1.msra.mxu0 0.0
    %937 = vmatprep.subr.mxu0 0.0
    %938 = vmatpush1.msra.mxu0 0.0
    %939 = vmatprep.subr.mxu0 0.0
    %940 = vmatpush1.msra.mxu0 0.0
    %941 = vmatprep.subr.mxu0 0.0
    %942 = vmatpush1.msra.mxu0 %v160
    %943 = vmatprep.subr.mxu0 0.0
    %944 = vmatpush1.msra.mxu0 %v159
    %945 = vmatprep.subr.mxu0 0.0
    %946 = vmatpush1.msra.mxu0 %v158
    %947 = vmatprep.subr.mxu0 0.0
    %948 = vmatpush1.msra.mxu0 %v157
    %949 = vmatprep.subr.mxu0 0.0
    %950 = vmatpush2.msra.mxu0 0.0
    %951 = vmatprep.subr.mxu0 0.0
    %952 = vmatpush2.msra.mxu0 0.0
    %953 = vmatprep.subr.mxu0 0.0
    %954 = vmatpush2.msra.mxu0 0.0
    %955 = vmatprep.subr.mxu0 0.0
    %956 = vmatpush2.msra.mxu0 0.0
    %957 = vmatprep.subr.mxu0 0.0
    %958 = vmatpush2.msra.mxu0 0.0
    %959 = vmatprep.subr.mxu0 0.0
    %960 = vmatpush2.msra.mxu0 0.0
    %961 = vmatprep.subr.mxu0 0.0
    %962 = vmatpush2.msra.mxu0 0.0
    %963 = vmatprep.subr.mxu0 0.0
    %964 = vmatpush2.msra.mxu0 0.0
    %965 = vmatprep.subr.mxu0 0.0
    %966 = vmatpush2.msra.mxu0 0.0
    %967 = vmatprep.subr.mxu0 0.0
    %968 = vmatpush2.msra.mxu0 0.0
    %969 = vmatprep.subr.mxu0 0.0
    %970 = vmatpush2.msra.mxu0 0.0
    %971 = vmatprep.subr.mxu0 0.0
    %972 = vmatpush2.msra.mxu0 0.0
    %973 = vmatprep.subr.mxu0 0.0
    %974 = vmatpush2.msra.mxu0 0.0
    %975 = vmatprep.subr.mxu0 0.0
    %976 = vmatpush2.msra.mxu0 0.0
    %977 = vmatprep.subr.mxu0 0.0
    %978 = vmatpush2.msra.mxu0 0.0
    %979 = vmatprep.subr.mxu0 0.0
    %980 = vmatpush2.msra.mxu0 0.0
    %981 = vmatprep.mubr.f32.mxu0 0.0
    %982 = vmatmul.mubr.f32.gmra.mxu0 %v915
    %v983 = vpop.f32.mrf.mxu0
    %v984 = vadd.f32 0.0, %v983
    %v985 = vpop.f32.mrf.mxu0
    %986 = vdwg.mxu0
    %v988 = vrot.slane %v984, 4
    %v990 = vadd.f32 %v154, %v988
    %v991 = vxor.u32 %v990, 2147483648
    %v992 = vmul.f32 %v991, 1.442695
    %v993 = vpow.pop %v992
    %v994 = vadd.f32 %v993, 1.0
    %v995 = vrcp.pop %v994
    %v996 = vmul.f32 1.0, %v995
    %v997 = vtanh.pop %v990
    %v999 = vrot.slane %v903, 4
    %v1001 = vmul.f32 %v996, %v999
    %1003 = vrot.lane.b32.xlu0 %v997, 64
    %v1004 = vpop.permute.xlu0 %1003
    %v1006 = vmul.f32 %v996, %v1004
    %1008 = vrot.lane.b32.xlu0 %v1006, 32
    %v1009 = vpop.permute.xlu0 %1008
    %v1011 = vadd.f32 %v1001, %v1009
    %v1012 = vtanh.pop %v1011
    %1014 = vrot.lane.b32.xlu0 %v1012, 64
    %v1015 = vpop.permute.xlu0 %1014
    %v1017 = vmul.f32 %v996, %v1015
    %1019 = vrot.lane.b32.xlu0 %v1017, 32
    %v1020 = vpop.permute.xlu0 %1019
    %1022 = vst.msk [vmem:[#allocation2 + $0x18] sm:$0xf0] %vm373, %v1020
    %v1023 = vld [vmem:[#allocation2] sm:$0xff]
    %v1024 = vld [vmem:[#allocation2 + $0x8] sm:$0xff]
    %v1025 = vld [vmem:[#allocation2 + $0x10] sm:$0xff]
    %v1026 = vld [vmem:[#allocation2 + $0x18] sm:$0xff]
    %v1027 = vld [vmem:[%s4] sm:$0xff]
    %v1028 = vld [vmem:[%s4 + $0x8] sm:$0xff]
    %v1029 = vld [vmem:[%s4 + $0x10] sm:$0xff]
    %v1030 = vld [vmem:[%s4 + $0x18] sm:$0xff]
    %v1031 = vld [vmem:[%s6] sm:$0x1]
    %v1033 = vlaneseq
    %v1034 = vshrl.u32 %v1033, 7
    %v1035 = vsub.s32 0, %v1034
    %v1036 = vrot.slane %v1031, %v1035
    %v1039 = vsel %vm161, %v1023, 0
    %v1042 = vsel %vm161, %v1024, 0
    %v1045 = vsel %vm161, %v1025, 0
    %v1048 = vsel %vm161, %v1026, 0
    %1050 = vmatprep.subr.mxu0 0.0
    %1051 = vmatpush1.msra.mxu0 0.0
    %1052 = vmatprep.subr.mxu0 0.0
    %1053 = vmatpush1.msra.mxu0 0.0
    %1054 = vmatprep.subr.mxu0 0.0
    %1055 = vmatpush1.msra.mxu0 0.0
    %1056 = vmatprep.subr.mxu0 0.0
    %1057 = vmatpush1.msra.mxu0 0.0
    %1058 = vmatprep.subr.mxu0 0.0
    %1059 = vmatpush1.msra.mxu0 0.0
    %1060 = vmatprep.subr.mxu0 0.0
    %1061 = vmatpush1.msra.mxu0 0.0
    %1062 = vmatprep.subr.mxu0 0.0
    %1063 = vmatpush1.msra.mxu0 0.0
    %1064 = vmatprep.subr.mxu0 0.0
    %1065 = vmatpush1.msra.mxu0 0.0
    %1066 = vmatprep.subr.mxu0 0.0
    %1067 = vmatpush1.msra.mxu0 0.0
    %1068 = vmatprep.subr.mxu0 0.0
    %1069 = vmatpush1.msra.mxu0 0.0
    %1070 = vmatprep.subr.mxu0 0.0
    %1071 = vmatpush1.msra.mxu0 0.0
    %1072 = vmatprep.subr.mxu0 0.0
    %1073 = vmatpush1.msra.mxu0 0.0
    %1074 = vmatprep.subr.mxu0 0.0
    %1075 = vmatpush1.msra.mxu0 %v1030
    %1076 = vmatprep.subr.mxu0 0.0
    %1077 = vmatpush1.msra.mxu0 %v1029
    %1078 = vmatprep.subr.mxu0 0.0
    %1079 = vmatpush1.msra.mxu0 %v1028
    %1080 = vmatprep.subr.mxu0 0.0
    %1081 = vmatpush1.msra.mxu0 %v1027
    %1082 = vmatprep.subr.mxu0 0.0
    %1083 = vmatpush2.msra.mxu0 0.0
    %1084 = vmatprep.subr.mxu0 0.0
    %1085 = vmatpush2.msra.mxu0 0.0
    %1086 = vmatprep.subr.mxu0 0.0
    %1087 = vmatpush2.msra.mxu0 0.0
    %1088 = vmatprep.subr.mxu0 0.0
    %1089 = vmatpush2.msra.mxu0 0.0
    %1090 = vmatprep.subr.mxu0 0.0
    %1091 = vmatpush2.msra.mxu0 0.0
    %1092 = vmatprep.subr.mxu0 0.0
    %1093 = vmatpush2.msra.mxu0 0.0
    %1094 = vmatprep.subr.mxu0 0.0
    %1095 = vmatpush2.msra.mxu0 0.0
    %1096 = vmatprep.subr.mxu0 0.0
    %1097 = vmatpush2.msra.mxu0 0.0
    %1098 = vmatprep.subr.mxu0 0.0
    %1099 = vmatpush2.msra.mxu0 0.0
    %1100 = vmatprep.subr.mxu0 0.0
    %1101 = vmatpush2.msra.mxu0 0.0
    %1102 = vmatprep.subr.mxu0 0.0
    %1103 = vmatpush2.msra.mxu0 0.0
    %1104 = vmatprep.subr.mxu0 0.0
    %1105 = vmatpush2.msra.mxu0 0.0
    %1106 = vmatprep.subr.mxu0 0.0
    %1107 = vmatpush2.msra.mxu0 0.0
    %1108 = vmatprep.subr.mxu0 0.0
    %1109 = vmatpush2.msra.mxu0 0.0
    %1110 = vmatprep.subr.mxu0 0.0
    %1111 = vmatpush2.msra.mxu0 0.0
    %1112 = vmatprep.subr.mxu0 0.0
    %1113 = vmatpush2.msra.mxu0 0.0
    %1114 = vmatprep.mubr.f32.mxu0 0.0
    %1115 = vmatmul.mubr.f32.gmra.mxu0 %v1039
    %v1116 = vpop.f32.mrf.mxu0
    %v1117 = vadd.f32 %v1036, %v1116
    %v1118 = vpop.f32.mrf.mxu0
    %1119 = vmatprep.mubr.f32.mxu0 0.0
    %1120 = vmatmul.mubr.f32.gmra.mxu0 %v1042
    %v1121 = vpop.f32.mrf.mxu0
    %v1122 = vadd.f32 %v1036, %v1121
    %v1123 = vpop.f32.mrf.mxu0
    %1124 = vmatprep.mubr.f32.mxu0 0.0
    %1125 = vmatmul.mubr.f32.gmra.mxu0 %v1045
    %v1126 = vpop.f32.mrf.mxu0
    %v1127 = vadd.f32 %v1036, %v1126
    %v1128 = vpop.f32.mrf.mxu0
    %1129 = vmatprep.mubr.f32.mxu0 0.0
    %1130 = vmatmul.mubr.f32.gmra.mxu0 %v1048
    %v1131 = vpop.f32.mrf.mxu0
    %v1132 = vadd.f32 %v1036, %v1131
    %v1133 = vpop.f32.mrf.mxu0
    %1134 = vdwg.mxu0
    %v1135 = vld [vmem:[%s5] sm:$0xff]
    %v1136 = vld [vmem:[%s5 + $0x8] sm:$0xff]
    %v1137 = vld [vmem:[%s5 + $0x10] sm:$0xff]
    %v1138 = vld [vmem:[%s5 + $0x18] sm:$0xff]
    %1139 = vmatprep.subr.mxu0 0.0
    %1140 = vmatpush1.msra.mxu0 0.0
    %1141 = vmatprep.subr.mxu0 0.0
    %1142 = vmatpush1.msra.mxu0 0.0
    %1143 = vmatprep.subr.mxu0 0.0
    %1144 = vmatpush1.msra.mxu0 0.0
    %1145 = vmatprep.subr.mxu0 0.0
    %1146 = vmatpush1.msra.mxu0 0.0
    %1147 = vmatprep.subr.mxu0 0.0
    %1148 = vmatpush1.msra.mxu0 0.0
    %1149 = vmatprep.subr.mxu0 0.0
    %1150 = vmatpush1.msra.mxu0 0.0
    %1151 = vmatprep.subr.mxu0 0.0
    %1152 = vmatpush1.msra.mxu0 0.0
    %1153 = vmatprep.subr.mxu0 0.0
    %1154 = vmatpush1.msra.mxu0 0.0
    %1155 = vmatprep.subr.mxu0 0.0
    %1156 = vmatpush1.msra.mxu0 0.0
    %1157 = vmatprep.subr.mxu0 0.0
    %1158 = vmatpush1.msra.mxu0 0.0
    %1159 = vmatprep.subr.mxu0 0.0
    %1160 = vmatpush1.msra.mxu0 0.0
    %1161 = vmatprep.subr.mxu0 0.0
    %1162 = vmatpush1.msra.mxu0 0.0
    %1163 = vmatprep.subr.mxu0 0.0
    %1164 = vmatpush1.msra.mxu0 %v1138
    %1165 = vmatprep.subr.mxu0 0.0
    %1166 = vmatpush1.msra.mxu0 %v1137
    %1167 = vmatprep.subr.mxu0 0.0
    %1168 = vmatpush1.msra.mxu0 %v1136
    %1169 = vmatprep.subr.mxu0 0.0
    %1170 = vmatpush1.msra.mxu0 %v1135
    %1171 = vmatprep.subr.mxu0 0.0
    %1172 = vmatpush2.msra.mxu0 0.0
    %1173 = vmatprep.subr.mxu0 0.0
    %1174 = vmatpush2.msra.mxu0 0.0
    %1175 = vmatprep.subr.mxu0 0.0
    %1176 = vmatpush2.msra.mxu0 0.0
    %1177 = vmatprep.subr.mxu0 0.0
    %1178 = vmatpush2.msra.mxu0 0.0
    %1179 = vmatprep.subr.mxu0 0.0
    %1180 = vmatpush2.msra.mxu0 0.0
    %1181 = vmatprep.subr.mxu0 0.0
    %1182 = vmatpush2.msra.mxu0 0.0
    %1183 = vmatprep.subr.mxu0 0.0
    %1184 = vmatpush2.msra.mxu0 0.0
    %1185 = vmatprep.subr.mxu0 0.0
    %1186 = vmatpush2.msra.mxu0 0.0
    %1187 = vmatprep.subr.mxu0 0.0
    %1188 = vmatpush2.msra.mxu0 0.0
    %1189 = vmatprep.subr.mxu0 0.0
    %1190 = vmatpush2.msra.mxu0 0.0
    %1191 = vmatprep.subr.mxu0 0.0
    %1192 = vmatpush2.msra.mxu0 0.0
    %1193 = vmatprep.subr.mxu0 0.0
    %1194 = vmatpush2.msra.mxu0 0.0
    %1195 = vmatprep.subr.mxu0 0.0
    %1196 = vmatpush2.msra.mxu0 0.0
    %1197 = vmatprep.subr.mxu0 0.0
    %1198 = vmatpush2.msra.mxu0 0.0
    %1199 = vmatprep.subr.mxu0 0.0
    %1200 = vmatpush2.msra.mxu0 0.0
    %1201 = vmatprep.subr.mxu0 0.0
    %1202 = vmatpush2.msra.mxu0 0.0
    %1203 = vmatprep.mubr.f32.mxu0 0.0
    %1204 = vmatmul.mubr.f32.gmra.mxu0 %v163
    %v1205 = vpop.f32.mrf.mxu0
    %v1206 = vadd.f32 0.0, %v1205
    %v1207 = vpop.f32.mrf.mxu0
    %1208 = vdwg.mxu0
    %v1209 = vadd.f32 %v1117, %v1206
    %v1210 = vxor.u32 %v1209, 2147483648
    %v1211 = vmul.f32 %v1210, 1.442695
    %v1212 = vpow.pop %v1211
    %v1213 = vadd.f32 %v1212, 1.0
    %v1214 = vrcp.pop %v1213
    %v1215 = vmul.f32 1.0, %v1214
    %v1216 = vtanh.pop %v1209
    %v1217 = vmul.f32 %v1215, 0.0
    %1219 = vrot.lane.b32.xlu0 %v1216, 64
    %v1220 = vpop.permute.xlu0 %1219
    %v1222 = vmul.f32 %v1215, %v1220
    %1224 = vrot.lane.b32.xlu0 %v1222, 32
    %v1225 = vpop.permute.xlu0 %1224
    %v1227 = vadd.f32 %v1217, %v1225
    %v1228 = vtanh.pop %v1227
    %1230 = vrot.lane.b32.xlu0 %v1228, 64
    %v1231 = vpop.permute.xlu0 %1230
    %v1233 = vmul.f32 %v1215, %v1231
    %1235 = vrot.lane.b32.xlu0 %v1233, 32
    %v1236 = vpop.permute.xlu0 %1235
    %1238 = vst.msk [vmem:[#allocation2] sm:$0xf] %vm264, %v1236
    %v1239 = vsel %vm161, %v1236, 0
    %1241 = vmatprep.subr.mxu0 0.0
    %1242 = vmatpush1.msra.mxu0 0.0
    %1243 = vmatprep.subr.mxu0 0.0
    %1244 = vmatpush1.msra.mxu0 0.0
    %1245 = vmatprep.subr.mxu0 0.0
    %1246 = vmatpush1.msra.mxu0 0.0
    %1247 = vmatprep.subr.mxu0 0.0
    %1248 = vmatpush1.msra.mxu0 0.0
    %1249 = vmatprep.subr.mxu0 0.0
    %1250 = vmatpush1.msra.mxu0 0.0
    %1251 = vmatprep.subr.mxu0 0.0
    %1252 = vmatpush1.msra.mxu0 0.0
    %1253 = vmatprep.subr.mxu0 0.0
    %1254 = vmatpush1.msra.mxu0 0.0
    %1255 = vmatprep.subr.mxu0 0.0
    %1256 = vmatpush1.msra.mxu0 0.0
    %1257 = vmatprep.subr.mxu0 0.0
    %1258 = vmatpush1.msra.mxu0 0.0
    %1259 = vmatprep.subr.mxu0 0.0
    %1260 = vmatpush1.msra.mxu0 0.0
    %1261 = vmatprep.subr.mxu0 0.0
    %1262 = vmatpush1.msra.mxu0 0.0
    %1263 = vmatprep.subr.mxu0 0.0
    %1264 = vmatpush1.msra.mxu0 0.0
    %1265 = vmatprep.subr.mxu0 0.0
    %1266 = vmatpush1.msra.mxu0 %v1138
    %1267 = vmatprep.subr.mxu0 0.0
    %1268 = vmatpush1.msra.mxu0 %v1137
    %1269 = vmatprep.subr.mxu0 0.0
    %1270 = vmatpush1.msra.mxu0 %v1136
    %1271 = vmatprep.subr.mxu0 0.0
    %1272 = vmatpush1.msra.mxu0 %v1135
    %1273 = vmatprep.subr.mxu0 0.0
    %1274 = vmatpush2.msra.mxu0 0.0
    %1275 = vmatprep.subr.mxu0 0.0
    %1276 = vmatpush2.msra.mxu0 0.0
    %1277 = vmatprep.subr.mxu0 0.0
    %1278 = vmatpush2.msra.mxu0 0.0
    %1279 = vmatprep.subr.mxu0 0.0
    %1280 = vmatpush2.msra.mxu0 0.0
    %1281 = vmatprep.subr.mxu0 0.0
    %1282 = vmatpush2.msra.mxu0 0.0
    %1283 = vmatprep.subr.mxu0 0.0
    %1284 = vmatpush2.msra.mxu0 0.0
    %1285 = vmatprep.subr.mxu0 0.0
    %1286 = vmatpush2.msra.mxu0 0.0
    %1287 = vmatprep.subr.mxu0 0.0
    %1288 = vmatpush2.msra.mxu0 0.0
    %1289 = vmatprep.subr.mxu0 0.0
    %1290 = vmatpush2.msra.mxu0 0.0
    %1291 = vmatprep.subr.mxu0 0.0
    %1292 = vmatpush2.msra.mxu0 0.0
    %1293 = vmatprep.subr.mxu0 0.0
    %1294 = vmatpush2.msra.mxu0 0.0
    %1295 = vmatprep.subr.mxu0 0.0
    %1296 = vmatpush2.msra.mxu0 0.0
    %1297 = vmatprep.subr.mxu0 0.0
    %1298 = vmatpush2.msra.mxu0 0.0
    %1299 = vmatprep.subr.mxu0 0.0
    %1300 = vmatpush2.msra.mxu0 0.0
    %1301 = vmatprep.subr.mxu0 0.0
    %1302 = vmatpush2.msra.mxu0 0.0
    %1303 = vmatprep.subr.mxu0 0.0
    %1304 = vmatpush2.msra.mxu0 0.0
    %1305 = vmatprep.mubr.f32.mxu0 0.0
    %1306 = vmatmul.mubr.f32.gmra.mxu0 %v1239
    %v1307 = vpop.f32.mrf.mxu0
    %v1308 = vadd.f32 0.0, %v1307
    %v1309 = vpop.f32.mrf.mxu0
    %1310 = vdwg.mxu0
    %v1312 = vrot.slane %v1308, 4
    %v1314 = vadd.f32 %v1117, %v1312
    %v1315 = vxor.u32 %v1314, 2147483648
    %v1316 = vmul.f32 %v1315, 1.442695
    %v1317 = vpow.pop %v1316
    %v1318 = vadd.f32 %v1317, 1.0
    %v1319 = vrcp.pop %v1318
    %v1320 = vmul.f32 1.0, %v1319
    %v1321 = vtanh.pop %v1314
    %v1323 = vrot.slane %v1227, 4
    %v1325 = vmul.f32 %v1320, %v1323
    %1327 = vrot.lane.b32.xlu0 %v1321, 64
    %v1328 = vpop.permute.xlu0 %1327
    %v1330 = vmul.f32 %v1320, %v1328
    %1332 = vrot.lane.b32.xlu0 %v1330, 32
    %v1333 = vpop.permute.xlu0 %1332
    %v1335 = vadd.f32 %v1325, %v1333
    %v1336 = vtanh.pop %v1335
    %1338 = vrot.lane.b32.xlu0 %v1336, 64
    %v1339 = vpop.permute.xlu0 %1338
    %v1341 = vmul.f32 %v1320, %v1339
    %1343 = vrot.lane.b32.xlu0 %v1341, 32
    %v1344 = vpop.permute.xlu0 %1343
    %1346 = vst.msk [vmem:[#allocation2] sm:$0xf0] %vm373, %v1344
    %v1347 = vrot.slane %v1341, 4
    %1348 = vrot.lane.b32.xlu0 %v1347, 32
    %v1349 = vpop.permute.xlu0 %1348
    %v1350 = vsel %vm161, %v1349, 0
    %1352 = vmatprep.subr.mxu0 0.0
    %1353 = vmatpush1.msra.mxu0 0.0
    %1354 = vmatprep.subr.mxu0 0.0
    %1355 = vmatpush1.msra.mxu0 0.0
    %1356 = vmatprep.subr.mxu0 0.0
    %1357 = vmatpush1.msra.mxu0 0.0
    %1358 = vmatprep.subr.mxu0 0.0
    %1359 = vmatpush1.msra.mxu0 0.0
    %1360 = vmatprep.subr.mxu0 0.0
    %1361 = vmatpush1.msra.mxu0 0.0
    %1362 = vmatprep.subr.mxu0 0.0
    %1363 = vmatpush1.msra.mxu0 0.0
    %1364 = vmatprep.subr.mxu0 0.0
    %1365 = vmatpush1.msra.mxu0 0.0
    %1366 = vmatprep.subr.mxu0 0.0
    %1367 = vmatpush1.msra.mxu0 0.0
    %1368 = vmatprep.subr.mxu0 0.0
    %1369 = vmatpush1.msra.mxu0 0.0
    %1370 = vmatprep.subr.mxu0 0.0
    %1371 = vmatpush1.msra.mxu0 0.0
    %1372 = vmatprep.subr.mxu0 0.0
    %1373 = vmatpush1.msra.mxu0 0.0
    %1374 = vmatprep.subr.mxu0 0.0
    %1375 = vmatpush1.msra.mxu0 0.0
    %1376 = vmatprep.subr.mxu0 0.0
    %1377 = vmatpush1.msra.mxu0 %v1138
    %1378 = vmatprep.subr.mxu0 0.0
    %1379 = vmatpush1.msra.mxu0 %v1137
    %1380 = vmatprep.subr.mxu0 0.0
    %1381 = vmatpush1.msra.mxu0 %v1136
    %1382 = vmatprep.subr.mxu0 0.0
    %1383 = vmatpush1.msra.mxu0 %v1135
    %1384 = vmatprep.subr.mxu0 0.0
    %1385 = vmatpush2.msra.mxu0 0.0
    %1386 = vmatprep.subr.mxu0 0.0
    %1387 = vmatpush2.msra.mxu0 0.0
    %1388 = vmatprep.subr.mxu0 0.0
    %1389 = vmatpush2.msra.mxu0 0.0
    %1390 = vmatprep.subr.mxu0 0.0
    %1391 = vmatpush2.msra.mxu0 0.0
    %1392 = vmatprep.subr.mxu0 0.0
    %1393 = vmatpush2.msra.mxu0 0.0
    %1394 = vmatprep.subr.mxu0 0.0
    %1395 = vmatpush2.msra.mxu0 0.0
    %1396 = vmatprep.subr.mxu0 0.0
    %1397 = vmatpush2.msra.mxu0 0.0
    %1398 = vmatprep.subr.mxu0 0.0
    %1399 = vmatpush2.msra.mxu0 0.0
    %1400 = vmatprep.subr.mxu0 0.0
    %1401 = vmatpush2.msra.mxu0 0.0
    %1402 = vmatprep.subr.mxu0 0.0
    %1403 = vmatpush2.msra.mxu0 0.0
    %1404 = vmatprep.subr.mxu0 0.0
    %1405 = vmatpush2.msra.mxu0 0.0
    %1406 = vmatprep.subr.mxu0 0.0
    %1407 = vmatpush2.msra.mxu0 0.0
    %1408 = vmatprep.subr.mxu0 0.0
    %1409 = vmatpush2.msra.mxu0 0.0
    %1410 = vmatprep.subr.mxu0 0.0
    %1411 = vmatpush2.msra.mxu0 0.0
    %1412 = vmatprep.subr.mxu0 0.0
    %1413 = vmatpush2.msra.mxu0 0.0
    %1414 = vmatprep.subr.mxu0 0.0
    %1415 = vmatpush2.msra.mxu0 0.0
    %1416 = vmatprep.mubr.f32.mxu0 0.0
    %1417 = vmatmul.mubr.f32.gmra.mxu0 %v1350
    %v1418 = vpop.f32.mrf.mxu0
    %v1419 = vadd.f32 0.0, %v1418
    %v1420 = vpop.f32.mrf.mxu0
    %1421 = vdwg.mxu0
    %v1422 = vadd.f32 %v1122, %v1419
    %v1423 = vxor.u32 %v1422, 2147483648
    %v1424 = vmul.f32 %v1423, 1.442695
    %v1425 = vpow.pop %v1424
    %v1426 = vadd.f32 %v1425, 1.0
    %v1427 = vrcp.pop %v1426
    %v1428 = vmul.f32 1.0, %v1427
    %v1429 = vtanh.pop %v1422
    %v1431 = vrot.slane %v1335, 4
    %v1433 = vmul.f32 %v1428, %v1431
    %1435 = vrot.lane.b32.xlu0 %v1429, 64
    %v1436 = vpop.permute.xlu0 %1435
    %v1438 = vmul.f32 %v1428, %v1436
    %1440 = vrot.lane.b32.xlu0 %v1438, 32
    %v1441 = vpop.permute.xlu0 %1440
    %v1443 = vadd.f32 %v1433, %v1441
    %v1444 = vtanh.pop %v1443
    %1446 = vrot.lane.b32.xlu0 %v1444, 64
    %v1447 = vpop.permute.xlu0 %1446
    %v1449 = vmul.f32 %v1428, %v1447
    %1451 = vrot.lane.b32.xlu0 %v1449, 32
    %v1452 = vpop.permute.xlu0 %1451
    %1454 = vst.msk [vmem:[#allocation2 + $0x8] sm:$0xf] %vm264, %v1452
    %v1455 = vsel %vm161, %v1452, 0
    %1457 = vmatprep.subr.mxu0 0.0
    %1458 = vmatpush1.msra.mxu0 0.0
    %1459 = vmatprep.subr.mxu0 0.0
    %1460 = vmatpush1.msra.mxu0 0.0
    %1461 = vmatprep.subr.mxu0 0.0
    %1462 = vmatpush1.msra.mxu0 0.0
    %1463 = vmatprep.subr.mxu0 0.0
    %1464 = vmatpush1.msra.mxu0 0.0
    %1465 = vmatprep.subr.mxu0 0.0
    %1466 = vmatpush1.msra.mxu0 0.0
    %1467 = vmatprep.subr.mxu0 0.0
    %1468 = vmatpush1.msra.mxu0 0.0
    %1469 = vmatprep.subr.mxu0 0.0
    %1470 = vmatpush1.msra.mxu0 0.0
    %1471 = vmatprep.subr.mxu0 0.0
    %1472 = vmatpush1.msra.mxu0 0.0
    %1473 = vmatprep.subr.mxu0 0.0
    %1474 = vmatpush1.msra.mxu0 0.0
    %1475 = vmatprep.subr.mxu0 0.0
    %1476 = vmatpush1.msra.mxu0 0.0
    %1477 = vmatprep.subr.mxu0 0.0
    %1478 = vmatpush1.msra.mxu0 0.0
    %1479 = vmatprep.subr.mxu0 0.0
    %1480 = vmatpush1.msra.mxu0 0.0
    %1481 = vmatprep.subr.mxu0 0.0
    %1482 = vmatpush1.msra.mxu0 %v1138
    %1483 = vmatprep.subr.mxu0 0.0
    %1484 = vmatpush1.msra.mxu0 %v1137
    %1485 = vmatprep.subr.mxu0 0.0
    %1486 = vmatpush1.msra.mxu0 %v1136
    %1487 = vmatprep.subr.mxu0 0.0
    %1488 = vmatpush1.msra.mxu0 %v1135
    %1489 = vmatprep.subr.mxu0 0.0
    %1490 = vmatpush2.msra.mxu0 0.0
    %1491 = vmatprep.subr.mxu0 0.0
    %1492 = vmatpush2.msra.mxu0 0.0
    %1493 = vmatprep.subr.mxu0 0.0
    %1494 = vmatpush2.msra.mxu0 0.0
    %1495 = vmatprep.subr.mxu0 0.0
    %1496 = vmatpush2.msra.mxu0 0.0
    %1497 = vmatprep.subr.mxu0 0.0
    %1498 = vmatpush2.msra.mxu0 0.0
    %1499 = vmatprep.subr.mxu0 0.0
    %1500 = vmatpush2.msra.mxu0 0.0
    %1501 = vmatprep.subr.mxu0 0.0
    %1502 = vmatpush2.msra.mxu0 0.0
    %1503 = vmatprep.subr.mxu0 0.0
    %1504 = vmatpush2.msra.mxu0 0.0
    %1505 = vmatprep.subr.mxu0 0.0
    %1506 = vmatpush2.msra.mxu0 0.0
    %1507 = vmatprep.subr.mxu0 0.0
    %1508 = vmatpush2.msra.mxu0 0.0
    %1509 = vmatprep.subr.mxu0 0.0
    %1510 = vmatpush2.msra.mxu0 0.0
    %1511 = vmatprep.subr.mxu0 0.0
    %1512 = vmatpush2.msra.mxu0 0.0
    %1513 = vmatprep.subr.mxu0 0.0
    %1514 = vmatpush2.msra.mxu0 0.0
    %1515 = vmatprep.subr.mxu0 0.0
    %1516 = vmatpush2.msra.mxu0 0.0
    %1517 = vmatprep.subr.mxu0 0.0
    %1518 = vmatpush2.msra.mxu0 0.0
    %1519 = vmatprep.subr.mxu0 0.0
    %1520 = vmatpush2.msra.mxu0 0.0
    %1521 = vmatprep.mubr.f32.mxu0 0.0
    %1522 = vmatmul.mubr.f32.gmra.mxu0 %v1455
    %v1523 = vpop.f32.mrf.mxu0
    %v1524 = vadd.f32 0.0, %v1523
    %v1525 = vpop.f32.mrf.mxu0
    %1526 = vdwg.mxu0
    %v1528 = vrot.slane %v1524, 4
    %v1530 = vadd.f32 %v1122, %v1528
    %v1531 = vxor.u32 %v1530, 2147483648
    %v1532 = vmul.f32 %v1531, 1.442695
    %v1533 = vpow.pop %v1532
    %v1534 = vadd.f32 %v1533, 1.0
    %v1535 = vrcp.pop %v1534
    %v1536 = vmul.f32 1.0, %v1535
    %v1537 = vtanh.pop %v1530
    %v1539 = vrot.slane %v1443, 4
    %v1541 = vmul.f32 %v1536, %v1539
    %1543 = vrot.lane.b32.xlu0 %v1537, 64
    %v1544 = vpop.permute.xlu0 %1543
    %v1546 = vmul.f32 %v1536, %v1544
    %1548 = vrot.lane.b32.xlu0 %v1546, 32
    %v1549 = vpop.permute.xlu0 %1548
    %v1551 = vadd.f32 %v1541, %v1549
    %v1552 = vtanh.pop %v1551
    %1554 = vrot.lane.b32.xlu0 %v1552, 64
    %v1555 = vpop.permute.xlu0 %1554
    %v1557 = vmul.f32 %v1536, %v1555
    %1559 = vrot.lane.b32.xlu0 %v1557, 32
    %v1560 = vpop.permute.xlu0 %1559
    %1562 = vst.msk [vmem:[#allocation2 + $0x8] sm:$0xf0] %vm373, %v1560
    %v1563 = vrot.slane %v1557, 4
    %1564 = vrot.lane.b32.xlu0 %v1563, 32
    %v1565 = vpop.permute.xlu0 %1564
    %v1566 = vsel %vm161, %v1565, 0
    %1568 = vmatprep.subr.mxu0 0.0
    %1569 = vmatpush1.msra.mxu0 0.0
    %1570 = vmatprep.subr.mxu0 0.0
    %1571 = vmatpush1.msra.mxu0 0.0
    %1572 = vmatprep.subr.mxu0 0.0
    %1573 = vmatpush1.msra.mxu0 0.0
    %1574 = vmatprep.subr.mxu0 0.0
    %1575 = vmatpush1.msra.mxu0 0.0
    %1576 = vmatprep.subr.mxu0 0.0
    %1577 = vmatpush1.msra.mxu0 0.0
    %1578 = vmatprep.subr.mxu0 0.0
    %1579 = vmatpush1.msra.mxu0 0.0
    %1580 = vmatprep.subr.mxu0 0.0
    %1581 = vmatpush1.msra.mxu0 0.0
    %1582 = vmatprep.subr.mxu0 0.0
    %1583 = vmatpush1.msra.mxu0 0.0
    %1584 = vmatprep.subr.mxu0 0.0
    %1585 = vmatpush1.msra.mxu0 0.0
    %1586 = vmatprep.subr.mxu0 0.0
    %1587 = vmatpush1.msra.mxu0 0.0
    %1588 = vmatprep.subr.mxu0 0.0
    %1589 = vmatpush1.msra.mxu0 0.0
    %1590 = vmatprep.subr.mxu0 0.0
    %1591 = vmatpush1.msra.mxu0 0.0
    %1592 = vmatprep.subr.mxu0 0.0
    %1593 = vmatpush1.msra.mxu0 %v1138
    %1594 = vmatprep.subr.mxu0 0.0
    %1595 = vmatpush1.msra.mxu0 %v1137
    %1596 = vmatprep.subr.mxu0 0.0
    %1597 = vmatpush1.msra.mxu0 %v1136
    %1598 = vmatprep.subr.mxu0 0.0
    %1599 = vmatpush1.msra.mxu0 %v1135
    %1600 = vmatprep.subr.mxu0 0.0
    %1601 = vmatpush2.msra.mxu0 0.0
    %1602 = vmatprep.subr.mxu0 0.0
    %1603 = vmatpush2.msra.mxu0 0.0
    %1604 = vmatprep.subr.mxu0 0.0
    %1605 = vmatpush2.msra.mxu0 0.0
    %1606 = vmatprep.subr.mxu0 0.0
    %1607 = vmatpush2.msra.mxu0 0.0
    %1608 = vmatprep.subr.mxu0 0.0
    %1609 = vmatpush2.msra.mxu0 0.0
    %1610 = vmatprep.subr.mxu0 0.0
    %1611 = vmatpush2.msra.mxu0 0.0
    %1612 = vmatprep.subr.mxu0 0.0
    %1613 = vmatpush2.msra.mxu0 0.0
    %1614 = vmatprep.subr.mxu0 0.0
    %1615 = vmatpush2.msra.mxu0 0.0
    %1616 = vmatprep.subr.mxu0 0.0
    %1617 = vmatpush2.msra.mxu0 0.0
    %1618 = vmatprep.subr.mxu0 0.0
    %1619 = vmatpush2.msra.mxu0 0.0
    %1620 = vmatprep.subr.mxu0 0.0
    %1621 = vmatpush2.msra.mxu0 0.0
    %1622 = vmatprep.subr.mxu0 0.0
    %1623 = vmatpush2.msra.mxu0 0.0
    %1624 = vmatprep.subr.mxu0 0.0
    %1625 = vmatpush2.msra.mxu0 0.0
    %1626 = vmatprep.subr.mxu0 0.0
    %1627 = vmatpush2.msra.mxu0 0.0
    %1628 = vmatprep.subr.mxu0 0.0
    %1629 = vmatpush2.msra.mxu0 0.0
    %1630 = vmatprep.subr.mxu0 0.0
    %1631 = vmatpush2.msra.mxu0 0.0
    %1632 = vmatprep.mubr.f32.mxu0 0.0
    %1633 = vmatmul.mubr.f32.gmra.mxu0 %v1566
    %v1634 = vpop.f32.mrf.mxu0
    %v1635 = vadd.f32 0.0, %v1634
    %v1636 = vpop.f32.mrf.mxu0
    %1637 = vdwg.mxu0
    %v1638 = vadd.f32 %v1127, %v1635
    %v1639 = vxor.u32 %v1638, 2147483648
    %v1640 = vmul.f32 %v1639, 1.442695
    %v1641 = vpow.pop %v1640
    %v1642 = vadd.f32 %v1641, 1.0
    %v1643 = vrcp.pop %v1642
    %v1644 = vmul.f32 1.0, %v1643
    %v1645 = vtanh.pop %v1638
    %v1647 = vrot.slane %v1551, 4
    %v1649 = vmul.f32 %v1644, %v1647
    %1651 = vrot.lane.b32.xlu0 %v1645, 64
    %v1652 = vpop.permute.xlu0 %1651
    %v1654 = vmul.f32 %v1644, %v1652
    %1656 = vrot.lane.b32.xlu0 %v1654, 32
    %v1657 = vpop.permute.xlu0 %1656
    %v1659 = vadd.f32 %v1649, %v1657
    %v1660 = vtanh.pop %v1659
    %1662 = vrot.lane.b32.xlu0 %v1660, 64
    %v1663 = vpop.permute.xlu0 %1662
    %v1665 = vmul.f32 %v1644, %v1663
    %1667 = vrot.lane.b32.xlu0 %v1665, 32
    %v1668 = vpop.permute.xlu0 %1667
    %1670 = vst.msk [vmem:[#allocation2 + $0x10] sm:$0xf] %vm264, %v1668
    %v1671 = vsel %vm161, %v1668, 0
    %1673 = vmatprep.subr.mxu0 0.0
    %1674 = vmatpush1.msra.mxu0 0.0
    %1675 = vmatprep.subr.mxu0 0.0
    %1676 = vmatpush1.msra.mxu0 0.0
    %1677 = vmatprep.subr.mxu0 0.0
    %1678 = vmatpush1.msra.mxu0 0.0
    %1679 = vmatprep.subr.mxu0 0.0
    %1680 = vmatpush1.msra.mxu0 0.0
    %1681 = vmatprep.subr.mxu0 0.0
    %1682 = vmatpush1.msra.mxu0 0.0
    %1683 = vmatprep.subr.mxu0 0.0
    %1684 = vmatpush1.msra.mxu0 0.0
    %1685 = vmatprep.subr.mxu0 0.0
    %1686 = vmatpush1.msra.mxu0 0.0
    %1687 = vmatprep.subr.mxu0 0.0
    %1688 = vmatpush1.msra.mxu0 0.0
    %1689 = vmatprep.subr.mxu0 0.0
    %1690 = vmatpush1.msra.mxu0 0.0
    %1691 = vmatprep.subr.mxu0 0.0
    %1692 = vmatpush1.msra.mxu0 0.0
    %1693 = vmatprep.subr.mxu0 0.0
    %1694 = vmatpush1.msra.mxu0 0.0
    %1695 = vmatprep.subr.mxu0 0.0
    %1696 = vmatpush1.msra.mxu0 0.0
    %1697 = vmatprep.subr.mxu0 0.0
    %1698 = vmatpush1.msra.mxu0 %v1138
    %1699 = vmatprep.subr.mxu0 0.0
    %1700 = vmatpush1.msra.mxu0 %v1137
    %1701 = vmatprep.subr.mxu0 0.0
    %1702 = vmatpush1.msra.mxu0 %v1136
    %1703 = vmatprep.subr.mxu0 0.0
    %1704 = vmatpush1.msra.mxu0 %v1135
    %1705 = vmatprep.subr.mxu0 0.0
    %1706 = vmatpush2.msra.mxu0 0.0
    %1707 = vmatprep.subr.mxu0 0.0
    %1708 = vmatpush2.msra.mxu0 0.0
    %1709 = vmatprep.subr.mxu0 0.0
    %1710 = vmatpush2.msra.mxu0 0.0
    %1711 = vmatprep.subr.mxu0 0.0
    %1712 = vmatpush2.msra.mxu0 0.0
    %1713 = vmatprep.subr.mxu0 0.0
    %1714 = vmatpush2.msra.mxu0 0.0
    %1715 = vmatprep.subr.mxu0 0.0
    %1716 = vmatpush2.msra.mxu0 0.0
    %1717 = vmatprep.subr.mxu0 0.0
    %1718 = vmatpush2.msra.mxu0 0.0
    %1719 = vmatprep.subr.mxu0 0.0
    %1720 = vmatpush2.msra.mxu0 0.0
    %1721 = vmatprep.subr.mxu0 0.0
    %1722 = vmatpush2.msra.mxu0 0.0
    %1723 = vmatprep.subr.mxu0 0.0
    %1724 = vmatpush2.msra.mxu0 0.0
    %1725 = vmatprep.subr.mxu0 0.0
    %1726 = vmatpush2.msra.mxu0 0.0
    %1727 = vmatprep.subr.mxu0 0.0
    %1728 = vmatpush2.msra.mxu0 0.0
    %1729 = vmatprep.subr.mxu0 0.0
    %1730 = vmatpush2.msra.mxu0 0.0
    %1731 = vmatprep.subr.mxu0 0.0
    %1732 = vmatpush2.msra.mxu0 0.0
    %1733 = vmatprep.subr.mxu0 0.0
    %1734 = vmatpush2.msra.mxu0 0.0
    %1735 = vmatprep.subr.mxu0 0.0
    %1736 = vmatpush2.msra.mxu0 0.0
    %1737 = vmatprep.mubr.f32.mxu0 0.0
    %1738 = vmatmul.mubr.f32.gmra.mxu0 %v1671
    %v1739 = vpop.f32.mrf.mxu0
    %v1740 = vadd.f32 0.0, %v1739
    %v1741 = vpop.f32.mrf.mxu0
    %1742 = vdwg.mxu0
    %v1744 = vrot.slane %v1740, 4
    %v1746 = vadd.f32 %v1127, %v1744
    %v1747 = vxor.u32 %v1746, 2147483648
    %v1748 = vmul.f32 %v1747, 1.442695
    %v1749 = vpow.pop %v1748
    %v1750 = vadd.f32 %v1749, 1.0
    %v1751 = vrcp.pop %v1750
    %v1752 = vmul.f32 1.0, %v1751
    %v1753 = vtanh.pop %v1746
    %v1755 = vrot.slane %v1659, 4
    %v1757 = vmul.f32 %v1752, %v1755
    %1759 = vrot.lane.b32.xlu0 %v1753, 64
    %v1760 = vpop.permute.xlu0 %1759
    %v1762 = vmul.f32 %v1752, %v1760
    %1764 = vrot.lane.b32.xlu0 %v1762, 32
    %v1765 = vpop.permute.xlu0 %1764
    %v1767 = vadd.f32 %v1757, %v1765
    %v1768 = vtanh.pop %v1767
    %1770 = vrot.lane.b32.xlu0 %v1768, 64
    %v1771 = vpop.permute.xlu0 %1770
    %v1773 = vmul.f32 %v1752, %v1771
    %1775 = vrot.lane.b32.xlu0 %v1773, 32
    %v1776 = vpop.permute.xlu0 %1775
    %1778 = vst.msk [vmem:[#allocation2 + $0x10] sm:$0xf0] %vm373, %v1776
    %v1779 = vrot.slane %v1773, 4
    %1780 = vrot.lane.b32.xlu0 %v1779, 32
    %v1781 = vpop.permute.xlu0 %1780
    %v1782 = vsel %vm161, %v1781, 0
    %1784 = vmatprep.subr.mxu0 0.0
    %1785 = vmatpush1.msra.mxu0 0.0
    %1786 = vmatprep.subr.mxu0 0.0
    %1787 = vmatpush1.msra.mxu0 0.0
    %1788 = vmatprep.subr.mxu0 0.0
    %1789 = vmatpush1.msra.mxu0 0.0
    %1790 = vmatprep.subr.mxu0 0.0
    %1791 = vmatpush1.msra.mxu0 0.0
    %1792 = vmatprep.subr.mxu0 0.0
    %1793 = vmatpush1.msra.mxu0 0.0
    %1794 = vmatprep.subr.mxu0 0.0
    %1795 = vmatpush1.msra.mxu0 0.0
    %1796 = vmatprep.subr.mxu0 0.0
    %1797 = vmatpush1.msra.mxu0 0.0
    %1798 = vmatprep.subr.mxu0 0.0
    %1799 = vmatpush1.msra.mxu0 0.0
    %1800 = vmatprep.subr.mxu0 0.0
    %1801 = vmatpush1.msra.mxu0 0.0
    %1802 = vmatprep.subr.mxu0 0.0
    %1803 = vmatpush1.msra.mxu0 0.0
    %1804 = vmatprep.subr.mxu0 0.0
    %1805 = vmatpush1.msra.mxu0 0.0
    %1806 = vmatprep.subr.mxu0 0.0
    %1807 = vmatpush1.msra.mxu0 0.0
    %1808 = vmatprep.subr.mxu0 0.0
    %1809 = vmatpush1.msra.mxu0 %v1138
    %1810 = vmatprep.subr.mxu0 0.0
    %1811 = vmatpush1.msra.mxu0 %v1137
    %1812 = vmatprep.subr.mxu0 0.0
    %1813 = vmatpush1.msra.mxu0 %v1136
    %1814 = vmatprep.subr.mxu0 0.0
    %1815 = vmatpush1.msra.mxu0 %v1135
    %1816 = vmatprep.subr.mxu0 0.0
    %1817 = vmatpush2.msra.mxu0 0.0
    %1818 = vmatprep.subr.mxu0 0.0
    %1819 = vmatpush2.msra.mxu0 0.0
    %1820 = vmatprep.subr.mxu0 0.0
    %1821 = vmatpush2.msra.mxu0 0.0
    %1822 = vmatprep.subr.mxu0 0.0
    %1823 = vmatpush2.msra.mxu0 0.0
    %1824 = vmatprep.subr.mxu0 0.0
    %1825 = vmatpush2.msra.mxu0 0.0
    %1826 = vmatprep.subr.mxu0 0.0
    %1827 = vmatpush2.msra.mxu0 0.0
    %1828 = vmatprep.subr.mxu0 0.0
    %1829 = vmatpush2.msra.mxu0 0.0
    %1830 = vmatprep.subr.mxu0 0.0
    %1831 = vmatpush2.msra.mxu0 0.0
    %1832 = vmatprep.subr.mxu0 0.0
    %1833 = vmatpush2.msra.mxu0 0.0
    %1834 = vmatprep.subr.mxu0 0.0
    %1835 = vmatpush2.msra.mxu0 0.0
    %1836 = vmatprep.subr.mxu0 0.0
    %1837 = vmatpush2.msra.mxu0 0.0
    %1838 = vmatprep.subr.mxu0 0.0
    %1839 = vmatpush2.msra.mxu0 0.0
    %1840 = vmatprep.subr.mxu0 0.0
    %1841 = vmatpush2.msra.mxu0 0.0
    %1842 = vmatprep.subr.mxu0 0.0
    %1843 = vmatpush2.msra.mxu0 0.0
    %1844 = vmatprep.subr.mxu0 0.0
    %1845 = vmatpush2.msra.mxu0 0.0
    %1846 = vmatprep.subr.mxu0 0.0
    %1847 = vmatpush2.msra.mxu0 0.0
    %1848 = vmatprep.mubr.f32.mxu0 0.0
    %1849 = vmatmul.mubr.f32.gmra.mxu0 %v1782
    %v1850 = vpop.f32.mrf.mxu0
    %v1851 = vadd.f32 0.0, %v1850
    %v1852 = vpop.f32.mrf.mxu0
    %1853 = vdwg.mxu0
    %v1854 = vadd.f32 %v1132, %v1851
    %v1855 = vxor.u32 %v1854, 2147483648
    %v1856 = vmul.f32 %v1855, 1.442695
    %v1857 = vpow.pop %v1856
    %v1858 = vadd.f32 %v1857, 1.0
    %v1859 = vrcp.pop %v1858
    %v1860 = vmul.f32 1.0, %v1859
    %v1861 = vtanh.pop %v1854
    %v1863 = vrot.slane %v1767, 4
    %v1865 = vmul.f32 %v1860, %v1863
    %1867 = vrot.lane.b32.xlu0 %v1861, 64
    %v1868 = vpop.permute.xlu0 %1867
    %v1870 = vmul.f32 %v1860, %v1868
    %1872 = vrot.lane.b32.xlu0 %v1870, 32
    %v1873 = vpop.permute.xlu0 %1872
    %v1875 = vadd.f32 %v1865, %v1873
    %v1876 = vtanh.pop %v1875
    %1878 = vrot.lane.b32.xlu0 %v1876, 64
    %v1879 = vpop.permute.xlu0 %1878
    %v1881 = vmul.f32 %v1860, %v1879
    %1883 = vrot.lane.b32.xlu0 %v1881, 32
    %v1884 = vpop.permute.xlu0 %1883
    %1886 = vst.msk [vmem:[#allocation2 + $0x18] sm:$0xf] %vm264, %v1884
    %v1887 = vsel %vm161, %v1884, 0
    %1889 = vmatprep.subr.mxu0 0.0
    %1890 = vmatpush1.msra.mxu0 0.0
    %1891 = vmatprep.subr.mxu0 0.0
    %1892 = vmatpush1.msra.mxu0 0.0
    %1893 = vmatprep.subr.mxu0 0.0
    %1894 = vmatpush1.msra.mxu0 0.0
    %1895 = vmatprep.subr.mxu0 0.0
    %1896 = vmatpush1.msra.mxu0 0.0
    %1897 = vmatprep.subr.mxu0 0.0
    %1898 = vmatpush1.msra.mxu0 0.0
    %1899 = vmatprep.subr.mxu0 0.0
    %1900 = vmatpush1.msra.mxu0 0.0
    %1901 = vmatprep.subr.mxu0 0.0
    %1902 = vmatpush1.msra.mxu0 0.0
    %1903 = vmatprep.subr.mxu0 0.0
    %1904 = vmatpush1.msra.mxu0 0.0
    %1905 = vmatprep.subr.mxu0 0.0
    %1906 = vmatpush1.msra.mxu0 0.0
    %1907 = vmatprep.subr.mxu0 0.0
    %1908 = vmatpush1.msra.mxu0 0.0
    %1909 = vmatprep.subr.mxu0 0.0
    %1910 = vmatpush1.msra.mxu0 0.0
    %1911 = vmatprep.subr.mxu0 0.0
    %1912 = vmatpush1.msra.mxu0 0.0
    %1913 = vmatprep.subr.mxu0 0.0
    %1914 = vmatpush1.msra.mxu0 %v1138
    %1915 = vmatprep.subr.mxu0 0.0
    %1916 = vmatpush1.msra.mxu0 %v1137
    %1917 = vmatprep.subr.mxu0 0.0
    %1918 = vmatpush1.msra.mxu0 %v1136
    %1919 = vmatprep.subr.mxu0 0.0
    %1920 = vmatpush1.msra.mxu0 %v1135
    %1921 = vmatprep.subr.mxu0 0.0
    %1922 = vmatpush2.msra.mxu0 0.0
    %1923 = vmatprep.subr.mxu0 0.0
    %1924 = vmatpush2.msra.mxu0 0.0
    %1925 = vmatprep.subr.mxu0 0.0
    %1926 = vmatpush2.msra.mxu0 0.0
    %1927 = vmatprep.subr.mxu0 0.0
    %1928 = vmatpush2.msra.mxu0 0.0
    %1929 = vmatprep.subr.mxu0 0.0
    %1930 = vmatpush2.msra.mxu0 0.0
    %1931 = vmatprep.subr.mxu0 0.0
    %1932 = vmatpush2.msra.mxu0 0.0
    %1933 = vmatprep.subr.mxu0 0.0
    %1934 = vmatpush2.msra.mxu0 0.0
    %1935 = vmatprep.subr.mxu0 0.0
    %1936 = vmatpush2.msra.mxu0 0.0
    %1937 = vmatprep.subr.mxu0 0.0
    %1938 = vmatpush2.msra.mxu0 0.0
    %1939 = vmatprep.subr.mxu0 0.0
    %1940 = vmatpush2.msra.mxu0 0.0
    %1941 = vmatprep.subr.mxu0 0.0
    %1942 = vmatpush2.msra.mxu0 0.0
    %1943 = vmatprep.subr.mxu0 0.0
    %1944 = vmatpush2.msra.mxu0 0.0
    %1945 = vmatprep.subr.mxu0 0.0
    %1946 = vmatpush2.msra.mxu0 0.0
    %1947 = vmatprep.subr.mxu0 0.0
    %1948 = vmatpush2.msra.mxu0 0.0
    %1949 = vmatprep.subr.mxu0 0.0
    %1950 = vmatpush2.msra.mxu0 0.0
    %1951 = vmatprep.subr.mxu0 0.0
    %1952 = vmatpush2.msra.mxu0 0.0
    %1953 = vmatprep.mubr.f32.mxu0 0.0
    %1954 = vmatmul.mubr.f32.gmra.mxu0 %v1887
    %v1955 = vpop.f32.mrf.mxu0
    %v1956 = vadd.f32 0.0, %v1955
    %v1957 = vpop.f32.mrf.mxu0
    %1958 = vdwg.mxu0
    %v1960 = vrot.slane %v1956, 4
    %v1962 = vadd.f32 %v1132, %v1960
    %v1963 = vxor.u32 %v1962, 2147483648
    %v1964 = vmul.f32 %v1963, 1.442695
    %v1965 = vpow.pop %v1964
    %v1966 = vadd.f32 %v1965, 1.0
    %v1967 = vrcp.pop %v1966
    %v1968 = vmul.f32 1.0, %v1967
    %v1969 = vtanh.pop %v1962
    %v1971 = vrot.slane %v1875, 4
    %v1973 = vmul.f32 %v1968, %v1971
    %1975 = vrot.lane.b32.xlu0 %v1969, 64
    %v1976 = vpop.permute.xlu0 %1975
    %v1978 = vmul.f32 %v1968, %v1976
    %1980 = vrot.lane.b32.xlu0 %v1978, 32
    %v1981 = vpop.permute.xlu0 %1980
    %v1983 = vadd.f32 %v1973, %v1981
    %v1984 = vtanh.pop %v1983
    %1986 = vrot.lane.b32.xlu0 %v1984, 64
    %v1987 = vpop.permute.xlu0 %1986
    %v1989 = vmul.f32 %v1968, %v1987
    %1991 = vrot.lane.b32.xlu0 %v1989, 32
    %v1992 = vpop.permute.xlu0 %1991
    %1994 = vst.msk [vmem:[#allocation2 + $0x18] sm:$0xf0] %vm373, %v1992
    %v1995 = vld [vmem:[#allocation2] sm:$0xff]
    %v1996 = vld [vmem:[#allocation2 + $0x8] sm:$0xff]
    %v1997 = vld [vmem:[#allocation2 + $0x10] sm:$0xff]
    %v1998 = vld [vmem:[#allocation2 + $0x18] sm:$0xff]
    %v1999 = vld [vmem:[%s7] sm:$0xff]
    %v2000 = vld [vmem:[%s7 + $0x8] sm:$0xff]
    %v2001 = vld [vmem:[%s7 + $0x10] sm:$0xff]
    %v2002 = vld [vmem:[%s7 + $0x18] sm:$0xff]
    %v2003 = vld [vmem:[%s8] sm:$0x1]
    %v2005 = vlaneseq
    %v2006 = vshrl.u32 %v2005, 7
    %v2007 = vsub.s32 0, %v2006
    %v2008 = vrot.slane %v2003, %v2007
    %v2011 = vsel %vm161, %v1995, 0
    %v2014 = vsel %vm161, %v1996, 0
    %v2017 = vsel %vm161, %v1997, 0
    %v2020 = vsel %vm161, %v1998, 0
    %2022 = vmatprep.subr.mxu0 0.0
    %2023 = vmatpush1.msra.mxu0 0.0
    %2024 = vmatprep.subr.mxu0 0.0
    %2025 = vmatpush1.msra.mxu0 0.0
    %2026 = vmatprep.subr.mxu0 0.0
    %2027 = vmatpush1.msra.mxu0 0.0
    %2028 = vmatprep.subr.mxu0 0.0
    %2029 = vmatpush1.msra.mxu0 0.0
    %2030 = vmatprep.subr.mxu0 0.0
    %2031 = vmatpush1.msra.mxu0 0.0
    %2032 = vmatprep.subr.mxu0 0.0
    %2033 = vmatpush1.msra.mxu0 0.0
    %2034 = vmatprep.subr.mxu0 0.0
    %2035 = vmatpush1.msra.mxu0 0.0
    %2036 = vmatprep.subr.mxu0 0.0
    %2037 = vmatpush1.msra.mxu0 0.0
    %2038 = vmatprep.subr.mxu0 0.0
    %2039 = vmatpush1.msra.mxu0 0.0
    %2040 = vmatprep.subr.mxu0 0.0
    %2041 = vmatpush1.msra.mxu0 0.0
    %2042 = vmatprep.subr.mxu0 0.0
    %2043 = vmatpush1.msra.mxu0 0.0
    %2044 = vmatprep.subr.mxu0 0.0
    %2045 = vmatpush1.msra.mxu0 0.0
    %2046 = vmatprep.subr.mxu0 0.0
    %2047 = vmatpush1.msra.mxu0 %v2002
    %2048 = vmatprep.subr.mxu0 0.0
    %2049 = vmatpush1.msra.mxu0 %v2001
    %2050 = vmatprep.subr.mxu0 0.0
    %2051 = vmatpush1.msra.mxu0 %v2000
    %2052 = vmatprep.subr.mxu0 0.0
    %2053 = vmatpush1.msra.mxu0 %v1999
    %2054 = vmatprep.subr.mxu0 0.0
    %2055 = vmatpush2.msra.mxu0 0.0
    %2056 = vmatprep.subr.mxu0 0.0
    %2057 = vmatpush2.msra.mxu0 0.0
    %2058 = vmatprep.subr.mxu0 0.0
    %2059 = vmatpush2.msra.mxu0 0.0
    %2060 = vmatprep.subr.mxu0 0.0
    %2061 = vmatpush2.msra.mxu0 0.0
    %2062 = vmatprep.subr.mxu0 0.0
    %2063 = vmatpush2.msra.mxu0 0.0
    %2064 = vmatprep.subr.mxu0 0.0
    %2065 = vmatpush2.msra.mxu0 0.0
    %2066 = vmatprep.subr.mxu0 0.0
    %2067 = vmatpush2.msra.mxu0 0.0
    %2068 = vmatprep.subr.mxu0 0.0
    %2069 = vmatpush2.msra.mxu0 0.0
    %2070 = vmatprep.subr.mxu0 0.0
    %2071 = vmatpush2.msra.mxu0 0.0
    %2072 = vmatprep.subr.mxu0 0.0
    %2073 = vmatpush2.msra.mxu0 0.0
    %2074 = vmatprep.subr.mxu0 0.0
    %2075 = vmatpush2.msra.mxu0 0.0
    %2076 = vmatprep.subr.mxu0 0.0
    %2077 = vmatpush2.msra.mxu0 0.0
    %2078 = vmatprep.subr.mxu0 0.0
    %2079 = vmatpush2.msra.mxu0 0.0
    %2080 = vmatprep.subr.mxu0 0.0
    %2081 = vmatpush2.msra.mxu0 0.0
    %2082 = vmatprep.subr.mxu0 0.0
    %2083 = vmatpush2.msra.mxu0 0.0
    %2084 = vmatprep.subr.mxu0 0.0
    %2085 = vmatpush2.msra.mxu0 0.0
    %2086 = vmatprep.mubr.f32.mxu0 0.0
    %2087 = vmatmul.mubr.f32.gmra.mxu0 %v2011
    %v2088 = vpop.f32.mrf.mxu0
    %v2089 = vadd.f32 %v2008, %v2088
    %v2090 = vpop.f32.mrf.mxu0
    %2091 = vmatprep.mubr.f32.mxu0 0.0
    %2092 = vmatmul.mubr.f32.gmra.mxu0 %v2014
    %v2093 = vpop.f32.mrf.mxu0
    %v2094 = vadd.f32 %v2008, %v2093
    %v2095 = vpop.f32.mrf.mxu0
    %2096 = vmatprep.mubr.f32.mxu0 0.0
    %2097 = vmatmul.mubr.f32.gmra.mxu0 %v2017
    %v2098 = vpop.f32.mrf.mxu0
    %v2099 = vadd.f32 %v2008, %v2098
    %v2100 = vpop.f32.mrf.mxu0
    %2101 = vmatprep.mubr.f32.mxu0 0.0
    %2102 = vmatmul.mubr.f32.gmra.mxu0 %v2020
    %v2103 = vpop.f32.mrf.mxu0
    %v2104 = vadd.f32 %v2008, %v2103
    %v2105 = vpop.f32.mrf.mxu0
    %2106 = vdwg.mxu0
    %vm2107 = vcmask 64512
    %2108 = vst.msk [vmem:[%s9] sm:$0xff] %vm2107, %v2089
    %2109 = vst.msk [vmem:[%s9 + $0x8] sm:$0xff] %vm2107, %v2094
    %2110 = vst.msk [vmem:[%s9 + $0x10] sm:$0xff] %vm2107, %v2099
    %2111 = vst.msk [vmem:[%s9 + $0x18] sm:$0xff] %vm2107, %v2104
    // Predicated region
    $region42: #{tpu_custom_call.1} parent=1 // pred_check
      _
    $region43: #{tpu_custom_call.1} parent=1 // pred_check_branch
      %2113 = sbr.rel (0) target = $region45
    $region44: #{tpu_custom_call.1} parent=1 // pred_region
      _
    $region45: #{tpu_custom_call.1} parent=1 // pred_fallthru
      _
    // Predicated region
    $region46: #{tpu_custom_call.1} parent=1 // pred_check
      _
    $region47: #{tpu_custom_call.1} parent=1 // pred_check_branch
      %2115 = sbr.rel (0) target = $region49
    $region48: #{tpu_custom_call.1} parent=1 // pred_region
      _
    $region49: #{tpu_custom_call.1} parent=1 // pred_fallthru
      _
    %2116 = vsyncpa [#allocation4], 1

</llo_original>
